<compile_context>
chip_gen: v5e
topology: v5e:2x2
jax: 0.10.0
libtpu: 0.0.40
codegen_flags: <defaults>
</compile_context>

<pallas_src>
import functools

import jax
import jax.numpy as jnp
from jax.experimental import pallas as pl
from jax.experimental.pallas import tpu as pltpu


# ----------------------------------------------------------------------------
# Kernel
# ----------------------------------------------------------------------------
def _strlm_kernel(tok_ref, emb_ref, w_ih_ref, w_hh_ref, b_ref,
                  w_proj_ref, b_proj_ref, out_ref, *scratch,
                  eos_idx, epsilon, context_k, pretrain, unrolled,
                  T, Bb, V, E, H):
    f32, bf16 = jnp.float32, jnp.bfloat16
    N = T * Bb                                   # rows, time-major: row = t*Bb + b

    tok = tok_ref[...]                           # (N, 1) int32

    # ---- embedding lookup --------------------------------------------------
    if V <= 512:
        # one-hot matmul on the MXU (bf16 operands, f32 accumulation)
        one_hot = (jax.lax.broadcasted_iota(jnp.int32, (N, V), 1) == tok).astype(bf16)
        emb_x = jnp.dot(one_hot, emb_ref[...], preferred_element_type=f32)   # (N, E)
    else:
        # TODO(synk): replace with scalar-prefetch / DMA row gather (emb in HBM)
        emb_x = jnp.take(emb_ref[...], tok[:, 0], axis=0).astype(f32)

    # ---- gate pre-activations for every (t, b) in one matmul ---------------
    xg = jnp.dot(emb_x.astype(bf16), w_ih_ref[...],
                 preferred_element_type=f32) + b_ref[...]                    # (N, 4H)

    # ---- single-layer LSTM, Bb batch rows per time step ---------------------
    w_hh = w_hh_ref[...]                         # (H, 4H) f32, resident across steps
    h = jnp.zeros((Bb, H), f32)
    c = jnp.zeros((Bb, H), f32)

    def cell(g, c_prev):
        i_g = jax.nn.sigmoid(g[:, 0 * H:1 * H])
        f_g = jax.nn.sigmoid(g[:, 1 * H:2 * H])
        g_g = jnp.tanh(g[:, 2 * H:3 * H])
        o_g = jax.nn.sigmoid(g[:, 3 * H:4 * H])
        c_new = f_g * c_prev + i_g * g_g
        h_new = o_g * jnp.tanh(c_new)
        return h_new, c_new

    if unrolled:
        hs_rows = []
        for t in range(T):                       # static unroll (small T)
            g = xg[t * Bb:(t + 1) * Bb, :] + jnp.dot(h, w_hh,
                                                     preferred_element_type=f32)
            h, c = cell(g, c)
            hs_rows.append(h)
        hs = jnp.concatenate(hs_rows, axis=0)    # (N, H), time-major
    else:
        xg_ref, hs_ref = scratch
        xg_ref[...] = xg                         # stage gates in VMEM once

        def body(t, carry):
            h, c = carry
            off = t * Bb
            if Bb % 8 == 0:
                off = pl.multiple_of(off, 8)
            g = xg_ref[pl.ds(off, Bb), :] + jnp.dot(h, w_hh,
                                                    preferred_element_type=f32)
            h, c = cell(g, c)
            hs_ref[pl.ds(off, Bb), :] = h
            return (h, c)

        unroll = 4 if T % 4 == 0 else (2 if T % 2 == 0 else 1)
        jax.lax.fori_loop(0, T, body, (h, c), unroll=unroll)
        hs = hs_ref[...]                         # (N, H)

    # ---- vocabulary projection ----------------------------------------------
    logits = jnp.dot(hs.astype(bf16), w_proj_ref[...],
                     preferred_element_type=f32) + b_proj_ref[...]           # (N, V)

    if pretrain:
        m = jnp.max(logits, axis=-1, keepdims=True)
        z = logits - m
        log_ps = z - jnp.log(jnp.sum(jnp.exp(z), axis=-1, keepdims=True))
    else:
        # ---- self-terminating head (all f32) ---------------------------------
        eos_logits = logits[:, eos_idx:eos_idx + 1]                          # (N, 1)
        betas = jnp.maximum((1.0 - epsilon) * jax.nn.sigmoid(eos_logits), 1e-10)
        row = jax.lax.broadcasted_iota(jnp.int32, (N, 1), 0)
        if context_k > 0:
            # row = t*Bb + b  =>  t < K  <=>  row < K*Bb
            betas = jnp.where(row < context_k * Bb, 1.0, betas)

        # inclusive prefix-sum of log(beta) over time: Hillis-Steele scan with
        # static shifts Bb, 2Bb, 4Bb, ... (same batch element only, log2(T) steps)
        cum = jnp.log(betas)
        shift = Bb
        while shift < N:
            prev = jnp.concatenate(
                [jnp.zeros((shift, 1), f32), cum[:N - shift, :]], axis=0)
            cum = cum + prev
            shift *= 2
        alphas = jnp.exp(cum)                                                # (N, 1)
        p_eoss = 1.0 - alphas

        # softmax over the non-eos vocabulary (eos column masked out, f32)
        col = jax.lax.broadcasted_iota(jnp.int32, (N, V), 1)
        is_eos_col = (col == eos_idx)
        masked = jnp.where(is_eos_col, -1e30, logits)
        m = jnp.max(masked, axis=-1, keepdims=True)
        e = jnp.where(is_eos_col, 0.0, jnp.exp(masked - m))
        p_v = alphas * (e / jnp.sum(e, axis=-1, keepdims=True))              # 0 at eos

        # clamp + normalize with the eos prob sitting in the eos column
        # (the normalizing sum is permutation invariant)
        combined = jnp.maximum(jnp.where(is_eos_col, p_eoss, p_v), 1e-10)
        log_norm = jnp.log(jnp.sum(combined, axis=-1, keepdims=True))
        log_comb = jnp.log(combined) - log_norm                              # (N, V)
        log_eos = jnp.log(jnp.maximum(p_eoss, 1e-10)) - log_norm             # (N, 1)

        # move the eos column to the last position, fully in registers:
        #   out[:, v] = log_comb[:, v]     for v <  eos_idx
        #   out[:, v] = log_comb[:, v+1]   for eos_idx <= v < V-1
        #   out[:, V-1] = log_eos
        shifted = jnp.concatenate([log_comb[:, 1:], log_comb[:, :1]], axis=-1)
        log_ps = jnp.where(col < eos_idx, log_comb, shifted)
        log_ps = jnp.where(col == V - 1, log_eos, log_ps)

    out_ref[...] = log_ps                        # single dense (N, V) store


# ----------------------------------------------------------------------------
# Wrapper
# ----------------------------------------------------------------------------
def _pick_batch_block(B):
    # Prefer >=8 rows per grid step (dense recurrent matmuls, sublane-aligned
    # slices) while keeping >=2 grid steps so both v7x TensorCores get work.
    for bb in (64, 32, 16, 8, 4, 2, 1):
        if B % bb == 0 and B // bb >= 2:
            return bb
    return B


def _vmem_limit_bytes():
    try:
        cap = int(pltpu.get_tpu_info().vmem_capacity_bytes)
    except Exception:
        cap = 64 * 1024 * 1024
    # ~75% of physical per-core VMEM: ~96 MiB on v5e/v6e, ~48 MiB on v7x.
    return max(32 * 1024 * 1024, min((cap * 3) // 4, 100 * 1024 * 1024))


def strlm_forward(tokens, params, *, eos_idx, epsilon, context_k, pretrain):
    """Pallas-backed forward of STRLMPretrainFinetune (return_extra=False)."""
    B, T = tokens.shape
    emb_w = params["emb"]            # (V, E)
    w_ih = params["w_ih"]            # (4H, E)
    w_hh = params["w_hh"]            # (4H, H)
    b = params["b"]                  # (1, 4H)  = b_ih + b_hh
    w_proj = params["w_proj"]        # (V, H)
    b_proj = params["b_proj"]        # (1, V)
    V, E = emb_w.shape
    H = w_hh.shape[1]

    Bb = _pick_batch_block(B)
    G = B // Bb
    N = T * Bb
    unrolled = T <= 32

    # Pre-transposed weights (no in-kernel transposes); bf16 copies for the big
    # MXU operands (f32 accumulation in the kernel). Recurrent weights / biases
    # stay f32.
    emb_bf = emb_w.astype(jnp.bfloat16)                    # (V, E)
    w_ih_t = jnp.transpose(w_ih).astype(jnp.bfloat16)      # (E, 4H)
    w_hh_t = jnp.transpose(w_hh).astype(jnp.float32)       # (H, 4H)
    w_proj_t = jnp.transpose(w_proj).astype(jnp.bfloat16)  # (H, V)

    # time-major, batch-blocked token layout: row = t*Bb + b (wrapper-side
    # layout plumbing; the kernel never reshapes across tile boundaries).
    tok_tm = jnp.transpose(tokens.astype(jnp.int32).reshape(G, Bb, T),
                           (0, 2, 1)).reshape(G, N, 1)

    kernel = functools.partial(
        _strlm_kernel, eos_idx=int(eos_idx), epsilon=float(epsilon),
        context_k=int(context_k), pretrain=bool(pretrain),
        unrolled=unrolled, T=T, Bb=Bb, V=V, E=E, H=H)

    scratch_shapes = []
    if not unrolled:
        scratch_shapes = [pltpu.VMEM((N, 4 * H), jnp.float32),   # staged gates
                          pltpu.VMEM((N, H), jnp.float32)]       # hidden states

    const2 = lambda g: (0, 0)
    in_specs = [
        pl.BlockSpec((None, N, 1), lambda g: (g, 0, 0)),   # tokens (time-major)
        pl.BlockSpec((V, E), const2),                      # emb        (bf16)
        pl.BlockSpec((E, 4 * H), const2),                  # w_ih^T     (bf16)
        pl.BlockSpec((H, 4 * H), const2),                  # w_hh^T     (f32)
        pl.BlockSpec((1, 4 * H), const2),                  # bias       (f32)
        pl.BlockSpec((H, V), const2),                      # w_proj^T   (bf16)
        pl.BlockSpec((1, V), const2),                      # b_proj     (f32)
    ]
    out_specs = pl.BlockSpec((None, N, V), lambda g: (g, 0, 0))
    out_shape = jax.ShapeDtypeStruct((G, N, V), jnp.float32)

    out = pl.pallas_call(
        kernel,
        out_shape=out_shape,
        grid_spec=pltpu.PrefetchScalarGridSpec(
            num_scalar_prefetch=0,
            grid=(G,),
            in_specs=in_specs,
            out_specs=out_specs,
            scratch_shapes=scratch_shapes),
        compiler_params=pltpu.CompilerParams(
            dimension_semantics=("parallel",),
            vmem_limit_bytes=_vmem_limit_bytes()),
    )(tok_tm, emb_bf, w_ih_t, w_hh_t, b.astype(jnp.float32),
      w_proj_t, b_proj.astype(jnp.float32))

    # undo the time-major / batch-block packing (wrapper-side, XLA)
    out = jnp.transpose(out.reshape(G, T, Bb, V), (0, 2, 1, 3))
    return out.reshape(B, T, V)


# ----------------------------------------------------------------------------
# Pure-JAX reference (mirrors the PyTorch forward)
# ----------------------------------------------------------------------------
def reference_forward(tokens, params, *, eos_idx, epsilon, context_k, pretrain):
    emb_w, w_ih, w_hh, b = params["emb"], params["w_ih"], params["w_hh"], params["b"]
    w_proj, b_proj = params["w_proj"], params["b_proj"]
    x = emb_w[tokens]                                            # (B, T, E)
    B, T, _ = x.shape
    H = w_hh.shape[1]
    xg = x @ w_ih.T + b[0]

    def step(carry, g_x):
        h, c = carry
        g = g_x + h @ w_hh.T
        i = jax.nn.sigmoid(g[:, :H]); f = jax.nn.sigmoid(g[:, H:2 * H])
        gg = jnp.tanh(g[:, 2 * H:3 * H]); o = jax.nn.sigmoid(g[:, 3 * H:])
        c = f * c + i * gg
        h = o * jnp.tanh(c)
        return (h, c), h

    (_, _), hs = jax.lax.scan(step,
                              (jnp.zeros((B, H)), jnp.zeros((B, H))),
                              jnp.swapaxes(xg, 0, 1))
    out = jnp.swapaxes(hs, 0, 1)                                 # (B, T, H)
    logits = out @ w_proj.T + b_proj[0]                          # (B, T, V)
    if pretrain:
        return jax.nn.log_softmax(logits, axis=-1)
    eos_logits = logits[:, :, eos_idx:eos_idx + 1]
    v_logits = jnp.concatenate(
        [logits[:, :, :eos_idx], logits[:, :, eos_idx + 1:]], axis=-1)
    betas = jnp.maximum((1.0 - epsilon) * jax.nn.sigmoid(eos_logits), 1e-10)
    if context_k > 0:
        tmask = (jnp.arange(T) < context_k)[None, :, None]
        betas = jnp.where(tmask, 1.0, betas)
    alphas = jnp.exp(jnp.cumsum(jnp.log(betas), axis=1))
    p_eoss = 1.0 - alphas
    p_vs = alphas * jax.nn.softmax(v_logits, axis=-1)
    ps = jnp.concatenate([p_vs, p_eoss], axis=-1)
    ps = jnp.maximum(ps, 1e-10)
    ps = ps / ps.sum(-1, keepdims=True)
    return jnp.log(ps)


# ----------------------------------------------------------------------------
# Test
# ----------------------------------------------------------------------------
def _make_params(key, V, E, H, padding_idx, tie):
    k_emb, k_ih, k_hh, k_bi, k_bh, k_bp, k_pr = jax.random.split(key, 7)
    emb = 0.1 * jax.random.normal(k_emb, (V, E), jnp.float32)
    emb = emb.at[padding_idx].set(0.0)                           # padding_idx row = 0
    # break_emb_weights=True -> projection weight is a copy of emb (needs H == E)
    w_proj = emb if tie else 0.1 * jax.random.normal(k_pr, (V, H), jnp.float32)
    return {
        "emb": emb,
        "w_ih": 0.1 * jax.random.normal(k_ih, (4 * H, E), jnp.float32),
        "w_hh": 0.1 * jax.random.normal(k_hh, (4 * H, H), jnp.float32),
        "b": (0.1 * jax.random.normal(k_bi, (4 * H,), jnp.float32)
              + 0.1 * jax.random.normal(k_bh, (4 * H,), jnp.float32))[None, :],
        "w_proj": w_proj,
        "b_proj": 0.1 * jax.random.normal(k_bp, (1, V), jnp.float32),
    }


if __name__ == "__main__":
    key = jax.random.PRNGKey(0)
    # Small shapes consistent with the module. B=16 so the batch-blocked path
    # (Bb=8 rows per grid step, 2 grid steps) is actually exercised; the second
    # config exercises the fori_loop LSTM path (T > 32).
    configs = [
        dict(B=16, T=8,  V=16, E=32, H=32, eos_idx=1, padding_idx=0,
             epsilon=0.01, context_k=2, tie=True),    # unrolled LSTM path
        dict(B=16, T=40, V=24, E=16, H=16, eos_idx=5, padding_idx=0,
             epsilon=0.05, context_k=0, tie=False),   # fori_loop LSTM path
    ]

    ok = True
    for ci, cfg in enumerate(configs):
        key, kp, kt = jax.random.split(key, 3)
        params = _make_params(kp, cfg["V"], cfg["E"], cfg["H"],
                              cfg["padding_idx"], cfg["tie"])
        tokens = jax.random.randint(kt, (cfg["B"], cfg["T"]), 0, cfg["V"],
                                    dtype=jnp.int32)
        for pretrain in (False, True):
            got = jax.block_until_ready(
                strlm_forward(tokens, params, eos_idx=cfg["eos_idx"],
                              epsilon=cfg["epsilon"],
                              context_k=cfg["context_k"], pretrain=pretrain))
            want = reference_forward(tokens, params, eos_idx=cfg["eos_idx"],
                                     epsilon=cfg["epsilon"],
                                     context_k=cfg["context_k"],
                                     pretrain=pretrain)
            # bf16 MXU operands (f32 accumulation) bound the error well below
            # this tolerance at these weight scales.
            if not jnp.allclose(got, want, atol=2e-2, rtol=2e-2):
                ok = False
                print(f"mismatch cfg={ci} pretrain={pretrain} "
                      f"max_abs_err={float(jnp.max(jnp.abs(got - want)))}")

    if ok:
        print("KERNEL_OK")
</pallas_src>

<mosaic_0001>
module attributes {stable_mosaic.version = 11 : i64} {
  func.func @_strlm_kernel(%arg0: i32, %arg1: memref<1x64x1xi32, #tpu.memory_space<vmem>>, %arg2: memref<16x32xbf16, #tpu.memory_space<vmem>>, %arg3: memref<32x128xbf16, #tpu.memory_space<vmem>>, %arg4: memref<32x128xf32, #tpu.memory_space<vmem>>, %arg5: memref<1x128xf32, #tpu.memory_space<vmem>>, %arg6: memref<32x16xbf16, #tpu.memory_space<vmem>>, %arg7: memref<1x16xf32, #tpu.memory_space<vmem>>, %arg8: memref<1x64x16xf32, #tpu.memory_space<vmem>>) attributes {dimension_semantics = [#tpu.dimension_semantics<parallel>], iteration_bounds = array<i64: 2>, scalar_prefetch = 0 : i64, scratch_operands = 0 : i64, tpu.core_type = #tpu.core_type<tc>, window_params = [{transform_indices = @transform_0, window_bounds = array<i64: 1, 64, 1>}, {pipeline_mode = #tpu.pipeline_mode<synchronous>, transform_indices = @transform_1, window_bounds = array<i64: 16, 32>}, {pipeline_mode = #tpu.pipeline_mode<synchronous>, transform_indices = @transform_2, window_bounds = array<i64: 32, 128>}, {pipeline_mode = #tpu.pipeline_mode<synchronous>, transform_indices = @transform_3, window_bounds = array<i64: 32, 128>}, {pipeline_mode = #tpu.pipeline_mode<synchronous>, transform_indices = @transform_4, window_bounds = array<i64: 1, 128>}, {pipeline_mode = #tpu.pipeline_mode<synchronous>, transform_indices = @transform_5, window_bounds = array<i64: 32, 16>}, {pipeline_mode = #tpu.pipeline_mode<synchronous>, transform_indices = @transform_6, window_bounds = array<i64: 1, 16>}, {transform_indices = @transform_7, window_bounds = array<i64: 1, 64, 16>}]} {
    %c0 = arith.constant 0 : index
    %c0_0 = arith.constant 0 : index
    %c0_1 = arith.constant 0 : index
    %0 = vector.load %arg1[%c0, %c0_0, %c0_1] : memref<1x64x1xi32, #tpu.memory_space<vmem>>, vector<1x64x1xi32>
    %1 = vector.shape_cast %0 : vector<1x64x1xi32> to vector<64x1xi32>
    %2 = tpu.iota {dimensions = array<i32: 1>} : vector<64x16xi32>
    %3 = vector.broadcast %1 : vector<64x1xi32> to vector<64x16xi32>
    %4 = arith.cmpi eq, %2, %3 : vector<64x16xi32>
    %5 = arith.extui %4 : vector<64x16xi1> to vector<64x16xi32>
    %6 = arith.sitofp %5 : vector<64x16xi32> to vector<64x16xf32>
    %7 = arith.truncf %6 : vector<64x16xf32> to vector<64x16xbf16>
    %c0_2 = arith.constant 0 : index
    %c0_3 = arith.constant 0 : index
    %8 = vector.load %arg2[%c0_2, %c0_3] : memref<16x32xbf16, #tpu.memory_space<vmem>>, vector<16x32xbf16>
    %cst = arith.constant dense<0.000000e+00> : vector<64x32xf32>
    %9 = tpu.matmul %7, %8, %cst {dimension_numbers = #tpu.dot_dimension_numbers<[1], [0], [0], [1], [0, 0, 1, 1], [], []>} : vector<64x16xbf16>, vector<16x32xbf16>, vector<64x32xf32> -> vector<64x32xf32>
    %10 = arith.truncf %9 : vector<64x32xf32> to vector<64x32xbf16>
    %c0_4 = arith.constant 0 : index
    %c0_5 = arith.constant 0 : index
    %11 = vector.load %arg3[%c0_4, %c0_5] : memref<32x128xbf16, #tpu.memory_space<vmem>>, vector<32x128xbf16>
    %cst_6 = arith.constant dense<0.000000e+00> : vector<64x128xf32>
    %12 = tpu.matmul %10, %11, %cst_6 {dimension_numbers = #tpu.dot_dimension_numbers<[1], [0], [0], [1], [0, 0, 1, 1], [], []>} : vector<64x32xbf16>, vector<32x128xbf16>, vector<64x128xf32> -> vector<64x128xf32>
    %c0_7 = arith.constant 0 : index
    %c0_8 = arith.constant 0 : index
    %13 = vector.load %arg5[%c0_7, %c0_8] : memref<1x128xf32, #tpu.memory_space<vmem>>, vector<1x128xf32>
    %14 = vector.broadcast %13 : vector<1x128xf32> to vector<64x128xf32>
    %15 = arith.addf %12, %14 : vector<64x128xf32>
    %c0_9 = arith.constant 0 : index
    %c0_10 = arith.constant 0 : index
    %16 = vector.load %arg4[%c0_9, %c0_10] : memref<32x128xf32, #tpu.memory_space<vmem>>, vector<32x128xf32>
    %cst_11 = arith.constant 0.000000e+00 : f32
    %17 = vector.broadcast %cst_11 : f32 to vector<8x32xf32>
    %cst_12 = arith.constant 0.000000e+00 : f32
    %18 = vector.broadcast %cst_12 : f32 to vector<8x32xf32>
    %19 = vector.extract_strided_slice %15 {offsets = [0, 0], sizes = [8, 128], strides = [1, 1]} : vector<64x128xf32> to vector<8x128xf32>
    %cst_13 = arith.constant dense<0.000000e+00> : vector<8x128xf32>
    %20 = tpu.matmul %17, %16, %cst_13 {dimension_numbers = #tpu.dot_dimension_numbers<[1], [0], [0], [1], [0, 0, 1, 1], [], []>} : vector<8x32xf32>, vector<32x128xf32>, vector<8x128xf32> -> vector<8x128xf32>
    %21 = arith.addf %19, %20 : vector<8x128xf32>
    %22 = vector.extract_strided_slice %21 {offsets = [0, 0], sizes = [8, 32], strides = [1, 1]} : vector<8x128xf32> to vector<8x32xf32>
    %23 = arith.negf %22 : vector<8x32xf32>
    %24 = math.exp %23 : vector<8x32xf32>
    %cst_14 = arith.constant 1.000000e+00 : f32
    %25 = vector.broadcast %cst_14 : f32 to vector<8x32xf32>
    %26 = arith.addf %25, %24 : vector<8x32xf32>
    %27 = arith.divf %25, %26 : vector<8x32xf32>
    %28 = vector.extract_strided_slice %21 {offsets = [0, 32], sizes = [8, 32], strides = [1, 1]} : vector<8x128xf32> to vector<8x32xf32>
    %29 = arith.negf %28 : vector<8x32xf32>
    %30 = math.exp %29 : vector<8x32xf32>
    %cst_15 = arith.constant 1.000000e+00 : f32
    %31 = vector.broadcast %cst_15 : f32 to vector<8x32xf32>
    %32 = arith.addf %31, %30 : vector<8x32xf32>
    %33 = arith.divf %31, %32 : vector<8x32xf32>
    %34 = vector.extract_strided_slice %21 {offsets = [0, 64], sizes = [8, 32], strides = [1, 1]} : vector<8x128xf32> to vector<8x32xf32>
    %35 = math.tanh %34 : vector<8x32xf32>
    %36 = vector.extract_strided_slice %21 {offsets = [0, 96], sizes = [8, 32], strides = [1, 1]} : vector<8x128xf32> to vector<8x32xf32>
    %37 = arith.negf %36 : vector<8x32xf32>
    %38 = math.exp %37 : vector<8x32xf32>
    %cst_16 = arith.constant 1.000000e+00 : f32
    %39 = vector.broadcast %cst_16 : f32 to vector<8x32xf32>
    %40 = arith.addf %39, %38 : vector<8x32xf32>
    %41 = arith.divf %39, %40 : vector<8x32xf32>
    %42 = arith.mulf %33, %18 : vector<8x32xf32>
    %43 = arith.mulf %27, %35 : vector<8x32xf32>
    %44 = arith.addf %42, %43 : vector<8x32xf32>
    %45 = math.tanh %44 : vector<8x32xf32>
    %46 = arith.mulf %41, %45 : vector<8x32xf32>
    %47 = vector.extract_strided_slice %15 {offsets = [8, 0], sizes = [8, 128], strides = [1, 1]} : vector<64x128xf32> to vector<8x128xf32>
    %cst_17 = arith.constant dense<0.000000e+00> : vector<8x128xf32>
    %48 = tpu.matmul %46, %16, %cst_17 {dimension_numbers = #tpu.dot_dimension_numbers<[1], [0], [0], [1], [0, 0, 1, 1], [], []>} : vector<8x32xf32>, vector<32x128xf32>, vector<8x128xf32> -> vector<8x128xf32>
    %49 = arith.addf %47, %48 : vector<8x128xf32>
    %50 = vector.extract_strided_slice %49 {offsets = [0, 0], sizes = [8, 32], strides = [1, 1]} : vector<8x128xf32> to vector<8x32xf32>
    %51 = arith.negf %50 : vector<8x32xf32>
    %52 = math.exp %51 : vector<8x32xf32>
    %cst_18 = arith.constant 1.000000e+00 : f32
    %53 = vector.broadcast %cst_18 : f32 to vector<8x32xf32>
    %54 = arith.addf %53, %52 : vector<8x32xf32>
    %55 = arith.divf %53, %54 : vector<8x32xf32>
    %56 = vector.extract_strided_slice %49 {offsets = [0, 32], sizes = [8, 32], strides = [1, 1]} : vector<8x128xf32> to vector<8x32xf32>
    %57 = arith.negf %56 : vector<8x32xf32>
    %58 = math.exp %57 : vector<8x32xf32>
    %cst_19 = arith.constant 1.000000e+00 : f32
    %59 = vector.broadcast %cst_19 : f32 to vector<8x32xf32>
    %60 = arith.addf %59, %58 : vector<8x32xf32>
    %61 = arith.divf %59, %60 : vector<8x32xf32>
    %62 = vector.extract_strided_slice %49 {offsets = [0, 64], sizes = [8, 32], strides = [1, 1]} : vector<8x128xf32> to vector<8x32xf32>
    %63 = math.tanh %62 : vector<8x32xf32>
    %64 = vector.extract_strided_slice %49 {offsets = [0, 96], sizes = [8, 32], strides = [1, 1]} : vector<8x128xf32> to vector<8x32xf32>
    %65 = arith.negf %64 : vector<8x32xf32>
    %66 = math.exp %65 : vector<8x32xf32>
    %cst_20 = arith.constant 1.000000e+00 : f32
    %67 = vector.broadcast %cst_20 : f32 to vector<8x32xf32>
    %68 = arith.addf %67, %66 : vector<8x32xf32>
    %69 = arith.divf %67, %68 : vector<8x32xf32>
    %70 = arith.mulf %61, %44 : vector<8x32xf32>
    %71 = arith.mulf %55, %63 : vector<8x32xf32>
    %72 = arith.addf %70, %71 : vector<8x32xf32>
    %73 = math.tanh %72 : vector<8x32xf32>
    %74 = arith.mulf %69, %73 : vector<8x32xf32>
    %75 = vector.extract_strided_slice %15 {offsets = [16, 0], sizes = [8, 128], strides = [1, 1]} : vector<64x128xf32> to vector<8x128xf32>
    %cst_21 = arith.constant dense<0.000000e+00> : vector<8x128xf32>
    %76 = tpu.matmul %74, %16, %cst_21 {dimension_numbers = #tpu.dot_dimension_numbers<[1], [0], [0], [1], [0, 0, 1, 1], [], []>} : vector<8x32xf32>, vector<32x128xf32>, vector<8x128xf32> -> vector<8x128xf32>
    %77 = arith.addf %75, %76 : vector<8x128xf32>
    %78 = vector.extract_strided_slice %77 {offsets = [0, 0], sizes = [8, 32], strides = [1, 1]} : vector<8x128xf32> to vector<8x32xf32>
    %79 = arith.negf %78 : vector<8x32xf32>
    %80 = math.exp %79 : vector<8x32xf32>
    %cst_22 = arith.constant 1.000000e+00 : f32
    %81 = vector.broadcast %cst_22 : f32 to vector<8x32xf32>
    %82 = arith.addf %81, %80 : vector<8x32xf32>
    %83 = arith.divf %81, %82 : vector<8x32xf32>
    %84 = vector.extract_strided_slice %77 {offsets = [0, 32], sizes = [8, 32], strides = [1, 1]} : vector<8x128xf32> to vector<8x32xf32>
    %85 = arith.negf %84 : vector<8x32xf32>
    %86 = math.exp %85 : vector<8x32xf32>
    %cst_23 = arith.constant 1.000000e+00 : f32
    %87 = vector.broadcast %cst_23 : f32 to vector<8x32xf32>
    %88 = arith.addf %87, %86 : vector<8x32xf32>
    %89 = arith.divf %87, %88 : vector<8x32xf32>
    %90 = vector.extract_strided_slice %77 {offsets = [0, 64], sizes = [8, 32], strides = [1, 1]} : vector<8x128xf32> to vector<8x32xf32>
    %91 = math.tanh %90 : vector<8x32xf32>
    %92 = vector.extract_strided_slice %77 {offsets = [0, 96], sizes = [8, 32], strides = [1, 1]} : vector<8x128xf32> to vector<8x32xf32>
    %93 = arith.negf %92 : vector<8x32xf32>
    %94 = math.exp %93 : vector<8x32xf32>
    %cst_24 = arith.constant 1.000000e+00 : f32
    %95 = vector.broadcast %cst_24 : f32 to vector<8x32xf32>
    %96 = arith.addf %95, %94 : vector<8x32xf32>
    %97 = arith.divf %95, %96 : vector<8x32xf32>
    %98 = arith.mulf %89, %72 : vector<8x32xf32>
    %99 = arith.mulf %83, %91 : vector<8x32xf32>
    %100 = arith.addf %98, %99 : vector<8x32xf32>
    %101 = math.tanh %100 : vector<8x32xf32>
    %102 = arith.mulf %97, %101 : vector<8x32xf32>
    %103 = vector.extract_strided_slice %15 {offsets = [24, 0], sizes = [8, 128], strides = [1, 1]} : vector<64x128xf32> to vector<8x128xf32>
    %cst_25 = arith.constant dense<0.000000e+00> : vector<8x128xf32>
    %104 = tpu.matmul %102, %16, %cst_25 {dimension_numbers = #tpu.dot_dimension_numbers<[1], [0], [0], [1], [0, 0, 1, 1], [], []>} : vector<8x32xf32>, vector<32x128xf32>, vector<8x128xf32> -> vector<8x128xf32>
    %105 = arith.addf %103, %104 : vector<8x128xf32>
    %106 = vector.extract_strided_slice %105 {offsets = [0, 0], sizes = [8, 32], strides = [1, 1]} : vector<8x128xf32> to vector<8x32xf32>
    %107 = arith.negf %106 : vector<8x32xf32>
    %108 = math.exp %107 : vector<8x32xf32>
    %cst_26 = arith.constant 1.000000e+00 : f32
    %109 = vector.broadcast %cst_26 : f32 to vector<8x32xf32>
    %110 = arith.addf %109, %108 : vector<8x32xf32>
    %111 = arith.divf %109, %110 : vector<8x32xf32>
    %112 = vector.extract_strided_slice %105 {offsets = [0, 32], sizes = [8, 32], strides = [1, 1]} : vector<8x128xf32> to vector<8x32xf32>
    %113 = arith.negf %112 : vector<8x32xf32>
    %114 = math.exp %113 : vector<8x32xf32>
    %cst_27 = arith.constant 1.000000e+00 : f32
    %115 = vector.broadcast %cst_27 : f32 to vector<8x32xf32>
    %116 = arith.addf %115, %114 : vector<8x32xf32>
    %117 = arith.divf %115, %116 : vector<8x32xf32>
    %118 = vector.extract_strided_slice %105 {offsets = [0, 64], sizes = [8, 32], strides = [1, 1]} : vector<8x128xf32> to vector<8x32xf32>
    %119 = math.tanh %118 : vector<8x32xf32>
    %120 = vector.extract_strided_slice %105 {offsets = [0, 96], sizes = [8, 32], strides = [1, 1]} : vector<8x128xf32> to vector<8x32xf32>
    %121 = arith.negf %120 : vector<8x32xf32>
    %122 = math.exp %121 : vector<8x32xf32>
    %cst_28 = arith.constant 1.000000e+00 : f32
    %123 = vector.broadcast %cst_28 : f32 to vector<8x32xf32>
    %124 = arith.addf %123, %122 : vector<8x32xf32>
    %125 = arith.divf %123, %124 : vector<8x32xf32>
    %126 = arith.mulf %117, %100 : vector<8x32xf32>
    %127 = arith.mulf %111, %119 : vector<8x32xf32>
    %128 = arith.addf %126, %127 : vector<8x32xf32>
    %129 = math.tanh %128 : vector<8x32xf32>
    %130 = arith.mulf %125, %129 : vector<8x32xf32>
    %131 = vector.extract_strided_slice %15 {offsets = [32, 0], sizes = [8, 128], strides = [1, 1]} : vector<64x128xf32> to vector<8x128xf32>
    %cst_29 = arith.constant dense<0.000000e+00> : vector<8x128xf32>
    %132 = tpu.matmul %130, %16, %cst_29 {dimension_numbers = #tpu.dot_dimension_numbers<[1], [0], [0], [1], [0, 0, 1, 1], [], []>} : vector<8x32xf32>, vector<32x128xf32>, vector<8x128xf32> -> vector<8x128xf32>
    %133 = arith.addf %131, %132 : vector<8x128xf32>
    %134 = vector.extract_strided_slice %133 {offsets = [0, 0], sizes = [8, 32], strides = [1, 1]} : vector<8x128xf32> to vector<8x32xf32>
    %135 = arith.negf %134 : vector<8x32xf32>
    %136 = math.exp %135 : vector<8x32xf32>
    %cst_30 = arith.constant 1.000000e+00 : f32
    %137 = vector.broadcast %cst_30 : f32 to vector<8x32xf32>
    %138 = arith.addf %137, %136 : vector<8x32xf32>
    %139 = arith.divf %137, %138 : vector<8x32xf32>
    %140 = vector.extract_strided_slice %133 {offsets = [0, 32], sizes = [8, 32], strides = [1, 1]} : vector<8x128xf32> to vector<8x32xf32>
    %141 = arith.negf %140 : vector<8x32xf32>
    %142 = math.exp %141 : vector<8x32xf32>
    %cst_31 = arith.constant 1.000000e+00 : f32
    %143 = vector.broadcast %cst_31 : f32 to vector<8x32xf32>
    %144 = arith.addf %143, %142 : vector<8x32xf32>
    %145 = arith.divf %143, %144 : vector<8x32xf32>
    %146 = vector.extract_strided_slice %133 {offsets = [0, 64], sizes = [8, 32], strides = [1, 1]} : vector<8x128xf32> to vector<8x32xf32>
    %147 = math.tanh %146 : vector<8x32xf32>
    %148 = vector.extract_strided_slice %133 {offsets = [0, 96], sizes = [8, 32], strides = [1, 1]} : vector<8x128xf32> to vector<8x32xf32>
    %149 = arith.negf %148 : vector<8x32xf32>
    %150 = math.exp %149 : vector<8x32xf32>
    %cst_32 = arith.constant 1.000000e+00 : f32
    %151 = vector.broadcast %cst_32 : f32 to vector<8x32xf32>
    %152 = arith.addf %151, %150 : vector<8x32xf32>
    %153 = arith.divf %151, %152 : vector<8x32xf32>
    %154 = arith.mulf %145, %128 : vector<8x32xf32>
    %155 = arith.mulf %139, %147 : vector<8x32xf32>
    %156 = arith.addf %154, %155 : vector<8x32xf32>
    %157 = math.tanh %156 : vector<8x32xf32>
    %158 = arith.mulf %153, %157 : vector<8x32xf32>
    %159 = vector.extract_strided_slice %15 {offsets = [40, 0], sizes = [8, 128], strides = [1, 1]} : vector<64x128xf32> to vector<8x128xf32>
    %cst_33 = arith.constant dense<0.000000e+00> : vector<8x128xf32>
    %160 = tpu.matmul %158, %16, %cst_33 {dimension_numbers = #tpu.dot_dimension_numbers<[1], [0], [0], [1], [0, 0, 1, 1], [], []>} : vector<8x32xf32>, vector<32x128xf32>, vector<8x128xf32> -> vector<8x128xf32>
    %161 = arith.addf %159, %160 : vector<8x128xf32>
    %162 = vector.extract_strided_slice %161 {offsets = [0, 0], sizes = [8, 32], strides = [1, 1]} : vector<8x128xf32> to vector<8x32xf32>
    %163 = arith.negf %162 : vector<8x32xf32>
    %164 = math.exp %163 : vector<8x32xf32>
    %cst_34 = arith.constant 1.000000e+00 : f32
    %165 = vector.broadcast %cst_34 : f32 to vector<8x32xf32>
    %166 = arith.addf %165, %164 : vector<8x32xf32>
    %167 = arith.divf %165, %166 : vector<8x32xf32>
    %168 = vector.extract_strided_slice %161 {offsets = [0, 32], sizes = [8, 32], strides = [1, 1]} : vector<8x128xf32> to vector<8x32xf32>
    %169 = arith.negf %168 : vector<8x32xf32>
    %170 = math.exp %169 : vector<8x32xf32>
    %cst_35 = arith.constant 1.000000e+00 : f32
    %171 = vector.broadcast %cst_35 : f32 to vector<8x32xf32>
    %172 = arith.addf %171, %170 : vector<8x32xf32>
    %173 = arith.divf %171, %172 : vector<8x32xf32>
    %174 = vector.extract_strided_slice %161 {offsets = [0, 64], sizes = [8, 32], strides = [1, 1]} : vector<8x128xf32> to vector<8x32xf32>
    %175 = math.tanh %174 : vector<8x32xf32>
    %176 = vector.extract_strided_slice %161 {offsets = [0, 96], sizes = [8, 32], strides = [1, 1]} : vector<8x128xf32> to vector<8x32xf32>
    %177 = arith.negf %176 : vector<8x32xf32>
    %178 = math.exp %177 : vector<8x32xf32>
    %cst_36 = arith.constant 1.000000e+00 : f32
    %179 = vector.broadcast %cst_36 : f32 to vector<8x32xf32>
    %180 = arith.addf %179, %178 : vector<8x32xf32>
    %181 = arith.divf %179, %180 : vector<8x32xf32>
    %182 = arith.mulf %173, %156 : vector<8x32xf32>
    %183 = arith.mulf %167, %175 : vector<8x32xf32>
    %184 = arith.addf %182, %183 : vector<8x32xf32>
    %185 = math.tanh %184 : vector<8x32xf32>
    %186 = arith.mulf %181, %185 : vector<8x32xf32>
    %187 = vector.extract_strided_slice %15 {offsets = [48, 0], sizes = [8, 128], strides = [1, 1]} : vector<64x128xf32> to vector<8x128xf32>
    %cst_37 = arith.constant dense<0.000000e+00> : vector<8x128xf32>
    %188 = tpu.matmul %186, %16, %cst_37 {dimension_numbers = #tpu.dot_dimension_numbers<[1], [0], [0], [1], [0, 0, 1, 1], [], []>} : vector<8x32xf32>, vector<32x128xf32>, vector<8x128xf32> -> vector<8x128xf32>
    %189 = arith.addf %187, %188 : vector<8x128xf32>
    %190 = vector.extract_strided_slice %189 {offsets = [0, 0], sizes = [8, 32], strides = [1, 1]} : vector<8x128xf32> to vector<8x32xf32>
    %191 = arith.negf %190 : vector<8x32xf32>
    %192 = math.exp %191 : vector<8x32xf32>
    %cst_38 = arith.constant 1.000000e+00 : f32
    %193 = vector.broadcast %cst_38 : f32 to vector<8x32xf32>
    %194 = arith.addf %193, %192 : vector<8x32xf32>
    %195 = arith.divf %193, %194 : vector<8x32xf32>
    %196 = vector.extract_strided_slice %189 {offsets = [0, 32], sizes = [8, 32], strides = [1, 1]} : vector<8x128xf32> to vector<8x32xf32>
    %197 = arith.negf %196 : vector<8x32xf32>
    %198 = math.exp %197 : vector<8x32xf32>
    %cst_39 = arith.constant 1.000000e+00 : f32
    %199 = vector.broadcast %cst_39 : f32 to vector<8x32xf32>
    %200 = arith.addf %199, %198 : vector<8x32xf32>
    %201 = arith.divf %199, %200 : vector<8x32xf32>
    %202 = vector.extract_strided_slice %189 {offsets = [0, 64], sizes = [8, 32], strides = [1, 1]} : vector<8x128xf32> to vector<8x32xf32>
    %203 = math.tanh %202 : vector<8x32xf32>
    %204 = vector.extract_strided_slice %189 {offsets = [0, 96], sizes = [8, 32], strides = [1, 1]} : vector<8x128xf32> to vector<8x32xf32>
    %205 = arith.negf %204 : vector<8x32xf32>
    %206 = math.exp %205 : vector<8x32xf32>
    %cst_40 = arith.constant 1.000000e+00 : f32
    %207 = vector.broadcast %cst_40 : f32 to vector<8x32xf32>
    %208 = arith.addf %207, %206 : vector<8x32xf32>
    %209 = arith.divf %207, %208 : vector<8x32xf32>
    %210 = arith.mulf %201, %184 : vector<8x32xf32>
    %211 = arith.mulf %195, %203 : vector<8x32xf32>
    %212 = arith.addf %210, %211 : vector<8x32xf32>
    %213 = math.tanh %212 : vector<8x32xf32>
    %214 = arith.mulf %209, %213 : vector<8x32xf32>
    %215 = vector.extract_strided_slice %15 {offsets = [56, 0], sizes = [8, 128], strides = [1, 1]} : vector<64x128xf32> to vector<8x128xf32>
    %cst_41 = arith.constant dense<0.000000e+00> : vector<8x128xf32>
    %216 = tpu.matmul %214, %16, %cst_41 {dimension_numbers = #tpu.dot_dimension_numbers<[1], [0], [0], [1], [0, 0, 1, 1], [], []>} : vector<8x32xf32>, vector<32x128xf32>, vector<8x128xf32> -> vector<8x128xf32>
    %217 = arith.addf %215, %216 : vector<8x128xf32>
    %218 = vector.extract_strided_slice %217 {offsets = [0, 0], sizes = [8, 32], strides = [1, 1]} : vector<8x128xf32> to vector<8x32xf32>
    %219 = arith.negf %218 : vector<8x32xf32>
    %220 = math.exp %219 : vector<8x32xf32>
    %cst_42 = arith.constant 1.000000e+00 : f32
    %221 = vector.broadcast %cst_42 : f32 to vector<8x32xf32>
    %222 = arith.addf %221, %220 : vector<8x32xf32>
    %223 = arith.divf %221, %222 : vector<8x32xf32>
    %224 = vector.extract_strided_slice %217 {offsets = [0, 32], sizes = [8, 32], strides = [1, 1]} : vector<8x128xf32> to vector<8x32xf32>
    %225 = arith.negf %224 : vector<8x32xf32>
    %226 = math.exp %225 : vector<8x32xf32>
    %cst_43 = arith.constant 1.000000e+00 : f32
    %227 = vector.broadcast %cst_43 : f32 to vector<8x32xf32>
    %228 = arith.addf %227, %226 : vector<8x32xf32>
    %229 = arith.divf %227, %228 : vector<8x32xf32>
    %230 = vector.extract_strided_slice %217 {offsets = [0, 64], sizes = [8, 32], strides = [1, 1]} : vector<8x128xf32> to vector<8x32xf32>
    %231 = math.tanh %230 : vector<8x32xf32>
    %232 = vector.extract_strided_slice %217 {offsets = [0, 96], sizes = [8, 32], strides = [1, 1]} : vector<8x128xf32> to vector<8x32xf32>
    %233 = arith.negf %232 : vector<8x32xf32>
    %234 = math.exp %233 : vector<8x32xf32>
    %cst_44 = arith.constant 1.000000e+00 : f32
    %235 = vector.broadcast %cst_44 : f32 to vector<8x32xf32>
    %236 = arith.addf %235, %234 : vector<8x32xf32>
    %237 = arith.divf %235, %236 : vector<8x32xf32>
    %238 = arith.mulf %229, %212 : vector<8x32xf32>
    %239 = arith.mulf %223, %231 : vector<8x32xf32>
    %240 = arith.addf %238, %239 : vector<8x32xf32>
    %241 = math.tanh %240 : vector<8x32xf32>
    %242 = arith.mulf %237, %241 : vector<8x32xf32>
    %243 = tpu.concatenate %46, %74, %102, %130, %158, %186, %214, %242 in 0 : vector<8x32xf32>, vector<8x32xf32>, vector<8x32xf32>, vector<8x32xf32>, vector<8x32xf32>, vector<8x32xf32>, vector<8x32xf32>, vector<8x32xf32> -> vector<64x32xf32>
    %244 = arith.truncf %243 : vector<64x32xf32> to vector<64x32xbf16>
    %c0_45 = arith.constant 0 : index
    %c0_46 = arith.constant 0 : index
    %245 = vector.load %arg6[%c0_45, %c0_46] : memref<32x16xbf16, #tpu.memory_space<vmem>>, vector<32x16xbf16>
    %cst_47 = arith.constant dense<0.000000e+00> : vector<64x16xf32>
    %246 = tpu.matmul %244, %245, %cst_47 {dimension_numbers = #tpu.dot_dimension_numbers<[1], [0], [0], [1], [0, 0, 1, 1], [], []>} : vector<64x32xbf16>, vector<32x16xbf16>, vector<64x16xf32> -> vector<64x16xf32>
    %c0_48 = arith.constant 0 : index
    %c0_49 = arith.constant 0 : index
    %247 = vector.load %arg7[%c0_48, %c0_49] : memref<1x16xf32, #tpu.memory_space<vmem>>, vector<1x16xf32>
    %248 = vector.broadcast %247 : vector<1x16xf32> to vector<64x16xf32>
    %249 = arith.addf %246, %248 : vector<64x16xf32>
    %250 = vector.extract_strided_slice %249 {offsets = [0, 1], sizes = [64, 1], strides = [1, 1]} : vector<64x16xf32> to vector<64x1xf32>
    %251 = arith.negf %250 : vector<64x1xf32>
    %252 = math.exp %251 : vector<64x1xf32>
    %cst_50 = arith.constant 1.000000e+00 : f32
    %253 = vector.broadcast %cst_50 : f32 to vector<64x1xf32>
    %254 = arith.addf %253, %252 : vector<64x1xf32>
    %255 = arith.divf %253, %254 : vector<64x1xf32>
    %cst_51 = arith.constant 9.900000e-01 : f32
    %256 = vector.broadcast %cst_51 : f32 to vector<64x1xf32>
    %257 = arith.mulf %256, %255 : vector<64x1xf32>
    %cst_52 = arith.constant 1.000000e-10 : f32
    %258 = vector.broadcast %cst_52 : f32 to vector<64x1xf32>
    %259 = arith.maximumf %257, %258 : vector<64x1xf32>
    %260 = tpu.iota {dimensions = array<i32: 0>} : vector<64x1xi32>
    %c16_i32 = arith.constant 16 : i32
    %261 = vector.broadcast %c16_i32 : i32 to vector<64x1xi32>
    %262 = arith.cmpi slt, %260, %261 : vector<64x1xi32>
    %cst_53 = arith.constant 1.000000e+00 : f32
    %263 = vector.broadcast %cst_53 : f32 to vector<64x1xf32>
    %264 = arith.select %262, %263, %259 : vector<64x1xi1>, vector<64x1xf32>
    %265 = math.log %264 : vector<64x1xf32>
    %cst_54 = arith.constant 0.000000e+00 : f32
    %266 = vector.broadcast %cst_54 : f32 to vector<8x1xf32>
    %267 = vector.extract_strided_slice %265 {offsets = [0, 0], sizes = [56, 1], strides = [1, 1]} : vector<64x1xf32> to vector<56x1xf32>
    %268 = tpu.concatenate %266, %267 in 0 : vector<8x1xf32>, vector<56x1xf32> -> vector<64x1xf32>
    %269 = arith.addf %265, %268 : vector<64x1xf32>
    %cst_55 = arith.constant 0.000000e+00 : f32
    %270 = vector.broadcast %cst_55 : f32 to vector<16x1xf32>
    %271 = vector.extract_strided_slice %269 {offsets = [0, 0], sizes = [48, 1], strides = [1, 1]} : vector<64x1xf32> to vector<48x1xf32>
    %272 = tpu.concatenate %270, %271 in 0 : vector<16x1xf32>, vector<48x1xf32> -> vector<64x1xf32>
    %273 = arith.addf %269, %272 : vector<64x1xf32>
    %cst_56 = arith.constant 0.000000e+00 : f32
    %274 = vector.broadcast %cst_56 : f32 to vector<32x1xf32>
    %275 = vector.extract_strided_slice %273 {offsets = [0, 0], sizes = [32, 1], strides = [1, 1]} : vector<64x1xf32> to vector<32x1xf32>
    %276 = tpu.concatenate %274, %275 in 0 : vector<32x1xf32>, vector<32x1xf32> -> vector<64x1xf32>
    %277 = arith.addf %273, %276 : vector<64x1xf32>
    %278 = math.exp %277 : vector<64x1xf32>
    %cst_57 = arith.constant 1.000000e+00 : f32
    %279 = vector.broadcast %cst_57 : f32 to vector<64x1xf32>
    %280 = arith.subf %279, %278 : vector<64x1xf32>
    %281 = tpu.iota {dimensions = array<i32: 1>} : vector<64x16xi32>
    %c1_i32 = arith.constant 1 : i32
    %282 = vector.broadcast %c1_i32 : i32 to vector<64x16xi32>
    %283 = arith.cmpi eq, %281, %282 : vector<64x16xi32>
    %cst_58 = arith.constant -1.000000e+30 : f32
    %284 = vector.broadcast %cst_58 : f32 to vector<64x16xf32>
    %285 = arith.select %283, %284, %249 : vector<64x16xi1>, vector<64x16xf32>
    %cst_59 = arith.constant dense<0xFF800000> : vector<64xf32>
    %286 = vector.multi_reduction <maximumf>, %285, %cst_59 [1] : vector<64x16xf32> to vector<64xf32>
    %287 = vector.shape_cast %286 : vector<64xf32> to vector<64x1xf32>
    %288 = vector.broadcast %287 : vector<64x1xf32> to vector<64x16xf32>
    %289 = arith.subf %285, %288 : vector<64x16xf32>
    %290 = math.exp %289 : vector<64x16xf32>
    %cst_60 = arith.constant 0.000000e+00 : f32
    %291 = vector.broadcast %cst_60 : f32 to vector<64x16xf32>
    %292 = arith.select %283, %291, %290 : vector<64x16xi1>, vector<64x16xf32>
    %cst_61 = arith.constant dense<0.000000e+00> : vector<64xf32>
    %293 = vector.multi_reduction <add>, %292, %cst_61 [1] : vector<64x16xf32> to vector<64xf32>
    %294 = vector.shape_cast %293 : vector<64xf32> to vector<64x1xf32>
    %295 = vector.broadcast %294 : vector<64x1xf32> to vector<64x16xf32>
    %296 = arith.divf %292, %295 : vector<64x16xf32>
    %297 = vector.broadcast %278 : vector<64x1xf32> to vector<64x16xf32>
    %298 = arith.mulf %297, %296 : vector<64x16xf32>
    %299 = vector.shape_cast %280 : vector<64x1xf32> to vector<64x1xf32>
    %300 = vector.broadcast %299 : vector<64x1xf32> to vector<64x16xf32>
    %301 = arith.select %283, %300, %298 : vector<64x16xi1>, vector<64x16xf32>
    %cst_62 = arith.constant 1.000000e-10 : f32
    %302 = vector.broadcast %cst_62 : f32 to vector<64x16xf32>
    %303 = arith.maximumf %301, %302 : vector<64x16xf32>
    %cst_63 = arith.constant dense<0.000000e+00> : vector<64xf32>
    %304 = vector.multi_reduction <add>, %303, %cst_63 [1] : vector<64x16xf32> to vector<64xf32>
    %305 = vector.shape_cast %304 : vector<64xf32> to vector<64x1xf32>
    %306 = math.log %305 : vector<64x1xf32>
    %307 = math.log %303 : vector<64x16xf32>
    %308 = vector.broadcast %306 : vector<64x1xf32> to vector<64x16xf32>
    %309 = arith.subf %307, %308 : vector<64x16xf32>
    %cst_64 = arith.constant 1.000000e-10 : f32
    %310 = vector.broadcast %cst_64 : f32 to vector<64x1xf32>
    %311 = arith.maximumf %280, %310 : vector<64x1xf32>
    %312 = math.log %311 : vector<64x1xf32>
    %313 = arith.subf %312, %306 : vector<64x1xf32>
    %314 = vector.extract_strided_slice %309 {offsets = [0, 1], sizes = [64, 15], strides = [1, 1]} : vector<64x16xf32> to vector<64x15xf32>
    %315 = vector.extract_strided_slice %309 {offsets = [0, 0], sizes = [64, 1], strides = [1, 1]} : vector<64x16xf32> to vector<64x1xf32>
    %316 = tpu.concatenate %314, %315 in 1 : vector<64x15xf32>, vector<64x1xf32> -> vector<64x16xf32>
    %c1_i32_65 = arith.constant 1 : i32
    %317 = vector.broadcast %c1_i32_65 : i32 to vector<64x16xi32>
    %318 = arith.cmpi slt, %281, %317 : vector<64x16xi32>
    %319 = arith.select %318, %309, %316 : vector<64x16xi1>, vector<64x16xf32>
    %c15_i32 = arith.constant 15 : i32
    %320 = vector.broadcast %c15_i32 : i32 to vector<64x16xi32>
    %321 = arith.cmpi eq, %281, %320 : vector<64x16xi32>
    %322 = vector.shape_cast %313 : vector<64x1xf32> to vector<64x1xf32>
    %323 = vector.broadcast %322 : vector<64x1xf32> to vector<64x16xf32>
    %324 = arith.select %321, %323, %319 : vector<64x16xi1>, vector<64x16xf32>
    %c0_66 = arith.constant 0 : index
    %c0_67 = arith.constant 0 : index
    %c0_68 = arith.constant 0 : index
    %325 = vector.load %arg8[%c0_66, %c0_67, %c0_68] : memref<1x64x16xf32, #tpu.memory_space<vmem>>, vector<1x64x16xf32>
    %326 = vector.shape_cast %325 : vector<1x64x16xf32> to vector<64x16xf32>
    %327 = vector.shape_cast %324 : vector<64x16xf32> to vector<1x64x16xf32>
    tpu.vector_store %arg8[%c0_66, %c0_67, %c0_68], %327 {strides = array<i32>} : memref<1x64x16xf32, #tpu.memory_space<vmem>>, vector<1x64x16xf32>,
    return
  }
  func.func @transform_0(%arg0: i32) -> (i32, i32, i32) {
    %c0_i32 = arith.constant 0 : i32
    %c0_i32_0 = arith.constant 0 : i32
    %c0_i32_1 = arith.constant 0 : i32
    return %arg0, %c0_i32, %c0_i32_0 : i32, i32, i32
  }
  func.func @transform_1(%arg0: i32) -> (i32, i32) {
    %c0_i32 = arith.constant 0 : i32
    %c0_i32_0 = arith.constant 0 : i32
    %c0_i32_1 = arith.constant 0 : i32
    return %c0_i32, %c0_i32_0 : i32, i32
  }
  func.func @transform_2(%arg0: i32) -> (i32, i32) {
    %c0_i32 = arith.constant 0 : i32
    %c0_i32_0 = arith.constant 0 : i32
    %c0_i32_1 = arith.constant 0 : i32
    return %c0_i32, %c0_i32_0 : i32, i32
  }
  func.func @transform_3(%arg0: i32) -> (i32, i32) {
    %c0_i32 = arith.constant 0 : i32
    %c0_i32_0 = arith.constant 0 : i32
    %c0_i32_1 = arith.constant 0 : i32
    return %c0_i32, %c0_i32_0 : i32, i32
  }
  func.func @transform_4(%arg0: i32) -> (i32, i32) {
    %c0_i32 = arith.constant 0 : i32
    %c0_i32_0 = arith.constant 0 : i32
    %c0_i32_1 = arith.constant 0 : i32
    return %c0_i32, %c0_i32_0 : i32, i32
  }
  func.func @transform_5(%arg0: i32) -> (i32, i32) {
    %c0_i32 = arith.constant 0 : i32
    %c0_i32_0 = arith.constant 0 : i32
    %c0_i32_1 = arith.constant 0 : i32
    return %c0_i32, %c0_i32_0 : i32, i32
  }
  func.func @transform_6(%arg0: i32) -> (i32, i32) {
    %c0_i32 = arith.constant 0 : i32
    %c0_i32_0 = arith.constant 0 : i32
    %c0_i32_1 = arith.constant 0 : i32
    return %c0_i32, %c0_i32_0 : i32, i32
  }
  func.func @transform_7(%arg0: i32) -> (i32, i32, i32) {
    %c0_i32 = arith.constant 0 : i32
    %c0_i32_0 = arith.constant 0 : i32
    %c0_i32_1 = arith.constant 0 : i32
    return %arg0, %c0_i32, %c0_i32_0 : i32, i32, i32
  }
}

</mosaic_0001>

<llo_original>
// kernel: tpu_custom_call.1
$region0: #{tpu_custom_call.1}
  #allocation0 [shape = 'u32[]', space=smem, size = 0x4, offset = 0x4, fixed_abs, tag = 'smem constant byte address 0x4 - core index']
  #allocation1 [shape = 'u32[72,128]{1,0:T(1,128)}', space=vmem, size = 0x9000, scoped, tag = 'internal scratch']
  %s0 = inlined_call_operand.vmem [shape: s32[2,64,1], index: 0, kind: input, shape index: {}]
  %s1 = inlined_call_operand.vmem [shape: bf16[16,32], index: 1, kind: input, shape index: {}]
  %s2 = inlined_call_operand.vmem [shape: bf16[32,128], index: 2, kind: input, shape index: {}]
  %s3 = inlined_call_operand.vmem [shape: f32[32,128], index: 3, kind: input, shape index: {}]
  %s4 = inlined_call_operand.vmem [shape: f32[1,128], index: 4, kind: input, shape index: {}]
  %s5 = inlined_call_operand.vmem [shape: bf16[32,16], index: 5, kind: input, shape index: {}]
  %s6 = inlined_call_operand.vmem [shape: f32[1,16], index: 6, kind: input, shape index: {}]
  %s7 = inlined_call_operand.vmem [shape: f32[2,64,16], index: 7, kind: output, shape index: {}]
  %s8 = sld [smem:[#allocation0]]
  $region61: #{tpu_custom_call.1} parent=0
    _
  %s10 = ssub.s32 1, %s8
  %s11 = scalar_select 0, %s10, %s8
  loop: start=0, step=1, limit=4
  $region2: #{tpu_custom_call.1} parent=0 // loop_pre_header
    _
  $region3: #{tpu_custom_call.1} parent=0 // loop_header
    %s13 = sphi 0, %s17
    %p14 = scmp.ge.s32.totalorder %s13, 4
    %s23 = sphi 0, %s25
    %s26 = sphi 0, %s23
    %s27 = sphi 0, %s26
    %s43 = sphi 0, %s27
    %s47 = sphi 0, %s47
    %s49 = sphi 0, %s47
    %s50 = sphi 0, %s49
    %s64 = sphi 0, %s50
    %s68 = sphi 0, %s68
    %s70 = sphi 0, %s68
    %s71 = sphi 0, %s70
    %s85 = sphi 0, %s71
    %s89 = sphi 0, %s89
    %s91 = sphi 0, %s89
    %s92 = sphi 0, %s91
    %s106 = sphi 0, %s92
    %s110 = sphi 0, %s110
    %s112 = sphi 0, %s110
    %s113 = sphi 0, %s112
    %s127 = sphi 0, %s113
    %s131 = sphi 0, %s131
    %s133 = sphi 0, %s131
    %s134 = sphi 0, %s133
    %s148 = sphi 0, %s134
    %s152 = sphi 0, %s152
    %s154 = sphi 0, %s152
    %s155 = sphi 0, %s154
    %s169 = sphi 0, %s155
    %s175 = sphi 0, %s177
    %s178 = sphi 0, %s175
    %s179 = sphi 0, %s178
    %s195 = sphi 0, %s179
  $region4: #{tpu_custom_call.1} parent=0 // loop_header_branch
    %16 = sbr.rel (%p14) target = $region8
  $region5: #{tpu_custom_call.1} parent=0 // loop_body
    %s18 = ssub.s32 %s13, 1
    %s19 = ssub.s32 %s13, 2
    %s20 = sadd.s32 %s13, 1
    %s21 = ssub.s32 %s13, %s20
    %p22 = scmp.eq.s32.totalorder %s21, 0
    %s24 = sadd.s32 %s23, 1
    %s25 = scalar_select %p22, %s23, %s24
    %p28 = pneg %p22
    %p29 = scmp.eq.s32.totalorder %s13, 1
    %p30 = por %p28, %p29
    %p31 = scmp.ne.s32.totalorder %s23, %s26
    %p32 = scmp.eq.s32.totalorder %s13, 0
    %p33 = por %p31, %p32
    %p34 = scmp.ne.s32.totalorder %s23, %s26
    %p35 = scmp.eq.s32.totalorder %s18, 1
    %p36 = por %p34, %p35
    %p37 = scmp.ne.s32.totalorder %s26, %s27
    %p38 = scmp.eq.s32.totalorder %s18, 0
    %p39 = por %p37, %p38
    %p40 = scmp.ne.s32.totalorder %s26, %s27
    %p41 = scmp.eq.s32.totalorder %s19, 1
    %p42 = por %p40, %p41
    %p44 = scmp.ne.s32.totalorder %s27, %s43
    %p45 = scmp.eq.s32.totalorder %s19, 0
    %p46 = por %p44, %p45
    %s48 = sadd.s32 %s47, 1
    %p51 = scmp.eq.s32.totalorder %s13, 1
    %p52 = scmp.ne.s32.totalorder %s47, %s49
    %p53 = scmp.eq.s32.totalorder %s13, 0
    %p54 = por %p52, %p53
    %p55 = scmp.ne.s32.totalorder %s47, %s49
    %p56 = scmp.eq.s32.totalorder %s18, 1
    %p57 = por %p55, %p56
    %p58 = scmp.ne.s32.totalorder %s49, %s50
    %p59 = scmp.eq.s32.totalorder %s18, 0
    %p60 = por %p58, %p59
    %p61 = scmp.ne.s32.totalorder %s49, %s50
    %p62 = scmp.eq.s32.totalorder %s19, 1
    %p63 = por %p61, %p62
    %p65 = scmp.ne.s32.totalorder %s50, %s64
    %p66 = scmp.eq.s32.totalorder %s19, 0
    %p67 = por %p65, %p66
    %s69 = sadd.s32 %s68, 1
    %p72 = scmp.eq.s32.totalorder %s13, 1
    %p73 = scmp.ne.s32.totalorder %s68, %s70
    %p74 = scmp.eq.s32.totalorder %s13, 0
    %p75 = por %p73, %p74
    %p76 = scmp.ne.s32.totalorder %s68, %s70
    %p77 = scmp.eq.s32.totalorder %s18, 1
    %p78 = por %p76, %p77
    %p79 = scmp.ne.s32.totalorder %s70, %s71
    %p80 = scmp.eq.s32.totalorder %s18, 0
    %p81 = por %p79, %p80
    %p82 = scmp.ne.s32.totalorder %s70, %s71
    %p83 = scmp.eq.s32.totalorder %s19, 1
    %p84 = por %p82, %p83
    %p86 = scmp.ne.s32.totalorder %s71, %s85
    %p87 = scmp.eq.s32.totalorder %s19, 0
    %p88 = por %p86, %p87
    %s90 = sadd.s32 %s89, 1
    %p93 = scmp.eq.s32.totalorder %s13, 1
    %p94 = scmp.ne.s32.totalorder %s89, %s91
    %p95 = scmp.eq.s32.totalorder %s13, 0
    %p96 = por %p94, %p95
    %p97 = scmp.ne.s32.totalorder %s89, %s91
    %p98 = scmp.eq.s32.totalorder %s18, 1
    %p99 = por %p97, %p98
    %p100 = scmp.ne.s32.totalorder %s91, %s92
    %p101 = scmp.eq.s32.totalorder %s18, 0
    %p102 = por %p100, %p101
    %p103 = scmp.ne.s32.totalorder %s91, %s92
    %p104 = scmp.eq.s32.totalorder %s19, 1
    %p105 = por %p103, %p104
    %p107 = scmp.ne.s32.totalorder %s92, %s106
    %p108 = scmp.eq.s32.totalorder %s19, 0
    %p109 = por %p107, %p108
    %s111 = sadd.s32 %s110, 1
    %p114 = scmp.eq.s32.totalorder %s13, 1
    %p115 = scmp.ne.s32.totalorder %s110, %s112
    %p116 = scmp.eq.s32.totalorder %s13, 0
    %p117 = por %p115, %p116
    %p118 = scmp.ne.s32.totalorder %s110, %s112
    %p119 = scmp.eq.s32.totalorder %s18, 1
    %p120 = por %p118, %p119
    %p121 = scmp.ne.s32.totalorder %s112, %s113
    %p122 = scmp.eq.s32.totalorder %s18, 0
    %p123 = por %p121, %p122
    %p124 = scmp.ne.s32.totalorder %s112, %s113
    %p125 = scmp.eq.s32.totalorder %s19, 1
    %p126 = por %p124, %p125
    %p128 = scmp.ne.s32.totalorder %s113, %s127
    %p129 = scmp.eq.s32.totalorder %s19, 0
    %p130 = por %p128, %p129
    %s132 = sadd.s32 %s131, 1
    %p135 = scmp.eq.s32.totalorder %s13, 1
    %p136 = scmp.ne.s32.totalorder %s131, %s133
    %p137 = scmp.eq.s32.totalorder %s13, 0
    %p138 = por %p136, %p137
    %p139 = scmp.ne.s32.totalorder %s131, %s133
    %p140 = scmp.eq.s32.totalorder %s18, 1
    %p141 = por %p139, %p140
    %p142 = scmp.ne.s32.totalorder %s133, %s134
    %p143 = scmp.eq.s32.totalorder %s18, 0
    %p144 = por %p142, %p143
    %p145 = scmp.ne.s32.totalorder %s133, %s134
    %p146 = scmp.eq.s32.totalorder %s19, 1
    %p147 = por %p145, %p146
    %p149 = scmp.ne.s32.totalorder %s134, %s148
    %p150 = scmp.eq.s32.totalorder %s19, 0
    %p151 = por %p149, %p150
    %s153 = sadd.s32 %s152, 1
    %p156 = scmp.eq.s32.totalorder %s13, 1
    %p157 = scmp.ne.s32.totalorder %s152, %s154
    %p158 = scmp.eq.s32.totalorder %s13, 0
    %p159 = por %p157, %p158
    %p160 = scmp.ne.s32.totalorder %s152, %s154
    %p161 = scmp.eq.s32.totalorder %s18, 1
    %p162 = por %p160, %p161
    %p163 = scmp.ne.s32.totalorder %s154, %s155
    %p164 = scmp.eq.s32.totalorder %s18, 0
    %p165 = por %p163, %p164
    %p166 = scmp.ne.s32.totalorder %s154, %s155
    %p167 = scmp.eq.s32.totalorder %s19, 1
    %p168 = por %p166, %p167
    %p170 = scmp.ne.s32.totalorder %s155, %s169
    %p171 = scmp.eq.s32.totalorder %s19, 0
    %p172 = por %p170, %p171
    %s173 = ssub.s32 %s13, %s20
    %p174 = scmp.eq.s32.totalorder %s173, 0
    %s176 = sadd.s32 %s175, 1
    %s177 = scalar_select %p174, %s175, %s176
    %p180 = pneg %p174
    %p181 = scmp.eq.s32.totalorder %s13, 1
    %p182 = por %p180, %p181
    %p183 = scmp.ne.s32.totalorder %s175, %s178
    %p184 = scmp.eq.s32.totalorder %s13, 0
    %p185 = por %p183, %p184
    %p186 = scmp.ne.s32.totalorder %s175, %s178
    %p187 = scmp.eq.s32.totalorder %s18, 1
    %p188 = por %p186, %p187
    %p189 = scmp.ne.s32.totalorder %s178, %s179
    %p190 = scmp.eq.s32.totalorder %s18, 0
    %p191 = por %p189, %p190
    %p192 = scmp.ne.s32.totalorder %s178, %s179
    %p193 = scmp.eq.s32.totalorder %s19, 1
    %p194 = por %p192, %p193
    %p196 = scmp.ne.s32.totalorder %s179, %s195
    %p197 = scmp.eq.s32.totalorder %s19, 0
    %p198 = por %p196, %p197
    %p199 = scmp.le.s32.totalorder 1, %s13
    %p200 = scmp.lt.s32.totalorder %s13, 3
    %p201 = pnand %p199, %p200
    %p202 = pneg %p201
    // Predicated region
    $region9: #{tpu_custom_call.1} parent=5 // pred_check
      _
    $region10: #{tpu_custom_call.1} parent=5 // pred_check_branch
      %204 = sbr.rel (%p201) target = $region12
    $region11: #{tpu_custom_call.1} parent=5 // pred_region
      %s205 = ssub.s32 %s13, 1
      // Predicated region
      $region13: #{tpu_custom_call.1} parent=11 // pred_check
        %p206 = pneg %p60
      $region14: #{tpu_custom_call.1} parent=11 // pred_check_branch
        %208 = sbr.rel (%p206) target = $region16
      $region15: #{tpu_custom_call.1} parent=11 // pred_region
        _
      $region16: #{tpu_custom_call.1} parent=11 // pred_fallthru
        _
      // Predicated region
      $region17: #{tpu_custom_call.1} parent=11 // pred_check
        %p209 = pneg %p81
      $region18: #{tpu_custom_call.1} parent=11 // pred_check_branch
        %211 = sbr.rel (%p209) target = $region20
      $region19: #{tpu_custom_call.1} parent=11 // pred_region
        _
      $region20: #{tpu_custom_call.1} parent=11 // pred_fallthru
        _
      // Predicated region
      $region21: #{tpu_custom_call.1} parent=11 // pred_check
        %p212 = pneg %p102
      $region22: #{tpu_custom_call.1} parent=11 // pred_check_branch
        %214 = sbr.rel (%p212) target = $region24
      $region23: #{tpu_custom_call.1} parent=11 // pred_region
        _
      $region24: #{tpu_custom_call.1} parent=11 // pred_fallthru
        _
      // Predicated region
      $region25: #{tpu_custom_call.1} parent=11 // pred_check
        %p215 = pneg %p123
      $region26: #{tpu_custom_call.1} parent=11 // pred_check_branch
        %217 = sbr.rel (%p215) target = $region28
      $region27: #{tpu_custom_call.1} parent=11 // pred_region
        _
      $region28: #{tpu_custom_call.1} parent=11 // pred_fallthru
        _
      // Predicated region
      $region29: #{tpu_custom_call.1} parent=11 // pred_check
        %p218 = pneg %p144
      $region30: #{tpu_custom_call.1} parent=11 // pred_check_branch
        %220 = sbr.rel (%p218) target = $region32
      $region31: #{tpu_custom_call.1} parent=11 // pred_region
        _
      $region32: #{tpu_custom_call.1} parent=11 // pred_fallthru
        _
      // Predicated region
      $region33: #{tpu_custom_call.1} parent=11 // pred_check
        %p221 = pneg %p165
      $region34: #{tpu_custom_call.1} parent=11 // pred_check_branch
        %223 = sbr.rel (%p221) target = $region36
      $region35: #{tpu_custom_call.1} parent=11 // pred_region
        _
      $region36: #{tpu_custom_call.1} parent=11 // pred_fallthru
        _
    $region12: #{tpu_custom_call.1} parent=5 // pred_fallthru
      _
    %p224 = scmp.lt.s32.totalorder %s13, 2
    // Predicated region
    $region37: #{tpu_custom_call.1} parent=5 // pred_check
      %p225 = pneg %p224
    $region38: #{tpu_custom_call.1} parent=5 // pred_check_branch
      %227 = sbr.rel (%p225) target = $region40
    $region39: #{tpu_custom_call.1} parent=5 // pred_region
      // Predicated region
      $region41: #{tpu_custom_call.1} parent=39 // pred_check
        %p228 = pneg %p33
      $region42: #{tpu_custom_call.1} parent=39 // pred_check_branch
        %230 = sbr.rel (%p228) target = $region44
      $region43: #{tpu_custom_call.1} parent=39 // pred_region
        %p231 = scmp.lt.s32.totalorder %s13, 1
        %s232 = scalar_select %p231, %s13, 1
        %s233 = smul.addr %s232, 8
        %s234 = smul.addr %s233, 8
        %s235 = scalar_lea.vmem %s0, %s234
      $region44: #{tpu_custom_call.1} parent=39 // pred_fallthru
        _
    $region40: #{tpu_custom_call.1} parent=5 // pred_fallthru
      _
    %p236 = scmp.le.s32.totalorder 1, %s13
    %p237 = scmp.lt.s32.totalorder %s13, 3
    %p238 = pnand %p236, %p237
    %p239 = pneg %p238
    // Predicated region
    $region45: #{tpu_custom_call.1} parent=5 // pred_check
      _
    $region46: #{tpu_custom_call.1} parent=5 // pred_check_branch
      %241 = sbr.rel (%p238) target = $region48
    $region47: #{tpu_custom_call.1} parent=5 // pred_region
      %s242 = ssub.s32 %s13, 1
      %p243 = scmp.lt.s32.totalorder %s18, 1
      %s244 = scalar_select %p243, %s18, 1
      %s245 = smul.addr %s244, 8
      %s246 = smul.addr %s245, 8
      %s247 = scalar_lea.vmem %s0, %s246
      %p248 = pneg %p39
      %p249 = pneg %p36
      %p250 = pneg %p60
      %p251 = pneg %p57
      %p252 = pneg %p81
      %p253 = pneg %p78
      %p254 = pneg %p102
      %p255 = pneg %p99
      %p256 = pneg %p123
      %p257 = pneg %p120
      %p258 = pneg %p144
      %p259 = pneg %p141
      %p260 = pneg %p165
      %p261 = pneg %p162
      %p262 = pneg %p191
      %p263 = pneg %p188
      %p264 = scmp.lt.s32.totalorder %s18, 1
      %s265 = scalar_select %p264, %s18, 1
      %s266 = smul.addr %s265, 8
      %s267 = smul.addr %s266, 8
      %s268 = scalar_lea.vmem %s7, %s267
      %p269 = scmp.lt.s32.totalorder %s18, 1
      %s270 = scalar_select %p269, %s18, 1
      %s271 = smul.addr %s270, 8
      %s272 = smul.addr %s271, 8
      %s273 = scalar_lea.vmem %s0, %s272
      %p274 = scmp.lt.s32.totalorder %s18, 1
      %s275 = scalar_select %p274, %s18, 1
      %s276 = smul.addr %s275, 8
      %s277 = smul.addr %s276, 8
      %s278 = scalar_lea.vmem %s7, %s277
      %v280 = vld [vmem:[%s273] sm:$0xff]
      %v281 = vld [vmem:[%s273 + $0x8] sm:$0xff]
      %v282 = vld [vmem:[%s273 + $0x10] sm:$0xff]
      %v283 = vld [vmem:[%s273 + $0x18] sm:$0xff]
      %v284 = vld [vmem:[%s273 + $0x20] sm:$0xff]
      %v285 = vld [vmem:[%s273 + $0x28] sm:$0xff]
      %v286 = vld [vmem:[%s273 + $0x30] sm:$0xff]
      %v287 = vld [vmem:[%s273 + $0x38] sm:$0xff]
      %v288 = vlaneseq
      %v289 = vand.u32 %v288, 127
      %290 = vset.pattern.permute.xlu0 0
      %291 = vperm.xlu0 %290, %v280
      %v292 = vpop.permute.xlu0 %291
      %293 = vset.pattern.permute.xlu0 0
      %294 = vperm.xlu0 %293, %v281
      %v295 = vpop.permute.xlu0 %294
      %296 = vset.pattern.permute.xlu0 0
      %297 = vperm.xlu0 %296, %v282
      %v298 = vpop.permute.xlu0 %297
      %299 = vset.pattern.permute.xlu0 0
      %300 = vperm.xlu0 %299, %v283
      %v301 = vpop.permute.xlu0 %300
      %302 = vset.pattern.permute.xlu0 0
      %303 = vperm.xlu0 %302, %v284
      %v304 = vpop.permute.xlu0 %303
      %305 = vset.pattern.permute.xlu0 0
      %306 = vperm.xlu0 %305, %v285
      %v307 = vpop.permute.xlu0 %306
      %308 = vset.pattern.permute.xlu0 0
      %309 = vperm.xlu0 %308, %v286
      %v310 = vpop.permute.xlu0 %309
      %311 = vset.pattern.permute.xlu0 0
      %312 = vperm.xlu0 %311, %v287
      %v313 = vpop.permute.xlu0 %312
      %vm314 = vcmp.eq.s32.totalorder %v289, %v292
      %vm315 = vcmp.eq.s32.totalorder %v289, %v295
      %vm316 = vcmp.eq.s32.totalorder %v289, %v298
      %vm317 = vcmp.eq.s32.totalorder %v289, %v301
      %vm318 = vcmp.eq.s32.totalorder %v289, %v304
      %vm319 = vcmp.eq.s32.totalorder %v289, %v307
      %vm320 = vcmp.eq.s32.totalorder %v289, %v310
      %vm321 = vcmp.eq.s32.totalorder %v289, %v313
      %v322 = vsel %vm314, 1, 0
      %v323 = vsel %vm315, 1, 0
      %v324 = vsel %vm316, 1, 0
      %v325 = vsel %vm317, 1, 0
      %v326 = vsel %vm318, 1, 0
      %v327 = vsel %vm319, 1, 0
      %v328 = vsel %vm320, 1, 0
      %v329 = vsel %vm321, 1, 0
      %v330 = vcvt.s32.f32 %v322
      %v331 = vcvt.s32.f32 %v323
      %v332 = vcvt.s32.f32 %v324
      %v333 = vcvt.s32.f32 %v325
      %v334 = vcvt.s32.f32 %v326
      %v335 = vcvt.s32.f32 %v327
      %v336 = vcvt.s32.f32 %v328
      %v337 = vcvt.s32.f32 %v329
      %v338 = vpack.c.bf16 %v331, %v330
      %v339 = vpack.c.bf16 %v333, %v332
      %v340 = vpack.c.bf16 %v335, %v334
      %v341 = vpack.c.bf16 %v337, %v336
      %v342 = vld [vmem:[%s1] sm:$0xf]
      %v343 = vld [vmem:[%s1 + $0x4] sm:$0xf]
      %v346 = vunpack.c.l.b16 %v342
      %v347 = vunpack.c.l.b16 %v343
      %v348 = vpack.c.b16 %v347, %v346
      %vm350 = vcmask 130048
      %v352 = vsel %vm350, %v338, 0
      %v355 = vsel %vm350, %v339, 0
      %v358 = vsel %vm350, %v340, 0
      %v361 = vsel %vm350, %v341, 0
      %363 = vmatpush.bf16.msra.mxu0 0
      %364 = vmatpush.bf16.msra.mxu0 0
      %365 = vmatpush.bf16.msra.mxu0 0
      %366 = vmatpush.bf16.msra.mxu0 0
      %367 = vmatpush.bf16.msra.mxu0 0
      %368 = vmatpush.bf16.msra.mxu0 0
      %369 = vmatpush.bf16.msra.mxu0 0
      %370 = vmatpush.bf16.msra.mxu0 %v348
      %371 = vmatmul.bf16.gmra.mxu0 %v352
      %v372 = vpop.f32.mrf.mxu0
      %v373 = vadd.f32 0.0, %v372
      %v374 = vpop.f32.mrf.mxu0
      %v375 = vadd.f32 0.0, %v374
      %376 = vmatmul.bf16.gmra.mxu0 %v355
      %v377 = vpop.f32.mrf.mxu0
      %v378 = vadd.f32 0.0, %v377
      %v379 = vpop.f32.mrf.mxu0
      %v380 = vadd.f32 0.0, %v379
      %381 = vmatmul.bf16.gmra.mxu0 %v358
      %v382 = vpop.f32.mrf.mxu0
      %v383 = vadd.f32 0.0, %v382
      %v384 = vpop.f32.mrf.mxu0
      %v385 = vadd.f32 0.0, %v384
      %386 = vmatmul.bf16.gmra.mxu0 %v361
      %v387 = vpop.f32.mrf.mxu0
      %v388 = vadd.f32 0.0, %v387
      %v389 = vpop.f32.mrf.mxu0
      %v390 = vadd.f32 0.0, %v389
      %391 = vdwg.mxu0
      %v392 = vpack.c.bf16 %v375, %v373
      %v393 = vpack.c.bf16 %v380, %v378
      %v394 = vpack.c.bf16 %v385, %v383
      %v395 = vpack.c.bf16 %v390, %v388
      %v396 = vld [vmem:[%s2] sm:$0xf]
      %v397 = vld [vmem:[%s2 + $0x4] sm:$0xf]
      %v398 = vld [vmem:[%s2 + $0x8] sm:$0xf]
      %v399 = vld [vmem:[%s2 + $0xc] sm:$0xf]
      %v400 = vld [vmem:[%s4] sm:$0x1]
      %v402 = vperm.slane %v400, 0
      %v408 = vunpack.c.l.b16 %v396
      %v409 = vunpack.c.l.b16 %v397
      %v410 = vunpack.c.l.b16 %v398
      %v411 = vunpack.c.l.b16 %v399
      %v412 = vpack.c.b16 %v409, %v408
      %v413 = vpack.c.b16 %v411, %v410
      %vm416 = vcmask 261120
      %v418 = vsel %vm416, %v392, 0
      %v421 = vsel %vm416, %v393, 0
      %v424 = vsel %vm416, %v394, 0
      %v427 = vsel %vm416, %v395, 0
      %429 = vmatpush.bf16.msra.mxu0 0
      %430 = vmatpush.bf16.msra.mxu0 0
      %431 = vmatpush.bf16.msra.mxu0 0
      %432 = vmatpush.bf16.msra.mxu0 0
      %433 = vmatpush.bf16.msra.mxu0 0
      %434 = vmatpush.bf16.msra.mxu0 0
      %435 = vmatpush.bf16.msra.mxu0 %v413
      %436 = vmatpush.bf16.msra.mxu0 %v412
      %437 = vmatmul.bf16.gmra.mxu0 %v418
      %v438 = vpop.f32.mrf.mxu0
      %v439 = vadd.f32 %v402, %v438
      %v440 = vpop.f32.mrf.mxu0
      %v441 = vadd.f32 %v402, %v440
      %442 = vmatmul.bf16.gmra.mxu0 %v421
      %v443 = vpop.f32.mrf.mxu0
      %v444 = vadd.f32 %v402, %v443
      %v445 = vpop.f32.mrf.mxu0
      %v446 = vadd.f32 %v402, %v445
      %447 = vmatmul.bf16.gmra.mxu0 %v424
      %v448 = vpop.f32.mrf.mxu0
      %v449 = vadd.f32 %v402, %v448
      %v450 = vpop.f32.mrf.mxu0
      %v451 = vadd.f32 %v402, %v450
      %452 = vmatmul.bf16.gmra.mxu0 %v427
      %v453 = vpop.f32.mrf.mxu0
      %v454 = vadd.f32 %v402, %v453
      %v455 = vpop.f32.mrf.mxu0
      %v456 = vadd.f32 %v402, %v455
      %457 = vdwg.mxu0
      %v458 = vld [vmem:[%s3] sm:$0xff]
      %v459 = vld [vmem:[%s3 + $0x8] sm:$0xff]
      %v460 = vld [vmem:[%s3 + $0x10] sm:$0xff]
      %v461 = vld [vmem:[%s3 + $0x18] sm:$0xff]
      %v463 = vsel %vm416, 0.0, 0
      %465 = vmatpush.msra.mxu0 0.0
      %466 = vmatpush.msra.mxu0 0.0
      %467 = vmatpush.msra.mxu0 0.0
      %468 = vmatpush.msra.mxu0 0.0
      %469 = vmatpush.msra.mxu0 0.0
      %470 = vmatpush.msra.mxu0 0.0
      %471 = vmatpush.msra.mxu0 0.0
      %472 = vmatpush.msra.mxu0 0.0
      %473 = vmatpush.msra.mxu0 0.0
      %474 = vmatpush.msra.mxu0 0.0
      %475 = vmatpush.msra.mxu0 0.0
      %476 = vmatpush.msra.mxu0 0.0
      %477 = vmatpush.msra.mxu0 %v461
      %478 = vmatpush.msra.mxu0 %v460
      %479 = vmatpush.msra.mxu0 %v459
      %480 = vmatpush.msra.mxu0 %v458
      %481 = vmatmul.f32.gmra.mxu0 %v463
      %v482 = vpop.f32.mrf.mxu0
      %v483 = vadd.f32 0.0, %v482
      %484 = vdwg.mxu0
      %v485 = vadd.f32 %v439, %v483
      %v486 = vxor.u32 %v485, 2147483648
      %v487 = vmul.f32 %v486, 1.442695
      %v488 = vpow.pop %v487
      %v489 = vadd.f32 %v488, 1.0
      %v490 = vrcp.pop %v489
      %v491 = vmul.f32 %v489, %v490
      %v492 = vsub.f32 1.0, %v491
      %v493 = vmul.f32 %v490, %v492
      %v494 = vadd.f32 %v490, %v493
      %vm495 = vweird.f32 %v489
      %vm496 = vweird.f32 %v490
      %vm497 = vmor %vm495, %vm496
      %v498 = vsel %vm497, %v490, %v494
      %v499 = vand.u32 2147483647, %v489
      %vm500 = vcmp.eq.f32.partialorder %v499, 8.507059e+37
      %v501 = vand.u32 %v489, 2147483648
      %v502 = vor.u32 1.1754944e-38, %v501
      %v503 = vsel %vm500, %v502, %v498
      %v504 = vmul.f32 1.0, %v503
      %v505 = vtanh.pop %v485
      %v506 = vmul.f32 %v504, 0.0
      %508 = vrot.lane.b32.xlu0 %v505, 64
      %v509 = vpop.permute.xlu0 %508
      %v511 = vmul.f32 %v504, %v509
      %513 = vrot.lane.b32.xlu0 %v511, 32
      %v514 = vpop.permute.xlu0 %513
      %v516 = vadd.f32 %v506, %v514
      %v517 = vtanh.pop %v516
      %519 = vrot.lane.b32.xlu0 %v517, 64
      %v520 = vpop.permute.xlu0 %519
      %v522 = vmul.f32 %v504, %v520
      %524 = vrot.lane.b32.xlu0 %v522, 32
      %v525 = vpop.permute.xlu0 %524
      %v526 = vsel %vm416, %v525, 0
      %528 = vmatpush.msra.mxu0 0.0
      %529 = vmatpush.msra.mxu0 0.0
      %530 = vmatpush.msra.mxu0 0.0
      %531 = vmatpush.msra.mxu0 0.0
      %532 = vmatpush.msra.mxu0 0.0
      %533 = vmatpush.msra.mxu0 0.0
      %534 = vmatpush.msra.mxu0 0.0
      %535 = vmatpush.msra.mxu0 0.0
      %536 = vmatpush.msra.mxu0 0.0
      %537 = vmatpush.msra.mxu0 0.0
      %538 = vmatpush.msra.mxu0 0.0
      %539 = vmatpush.msra.mxu0 0.0
      %540 = vmatpush.msra.mxu0 %v461
      %541 = vmatpush.msra.mxu0 %v460
      %542 = vmatpush.msra.mxu0 %v459
      %543 = vmatpush.msra.mxu0 %v458
      %544 = vmatmul.f32.gmra.mxu0 %v526
      %v545 = vpop.f32.mrf.mxu0
      %v546 = vadd.f32 0.0, %v545
      %547 = vdwg.mxu0
      %v548 = vadd.f32 %v441, %v546
      %v549 = vxor.u32 %v548, 2147483648
      %v550 = vmul.f32 %v549, 1.442695
      %v551 = vpow.pop %v550
      %v552 = vadd.f32 %v551, 1.0
      %v553 = vrcp.pop %v552
      %v554 = vmul.f32 %v552, %v553
      %v555 = vsub.f32 1.0, %v554
      %v556 = vmul.f32 %v553, %v555
      %v557 = vadd.f32 %v553, %v556
      %vm558 = vweird.f32 %v552
      %vm559 = vweird.f32 %v553
      %vm560 = vmor %vm558, %vm559
      %v561 = vsel %vm560, %v553, %v557
      %v562 = vand.u32 2147483647, %v552
      %vm563 = vcmp.eq.f32.partialorder %v562, 8.507059e+37
      %v564 = vand.u32 %v552, 2147483648
      %v565 = vor.u32 1.1754944e-38, %v564
      %v566 = vsel %vm563, %v565, %v561
      %v567 = vmul.f32 1.0, %v566
      %v568 = vtanh.pop %v548
      %v569 = vmul.f32 %v567, %v516
      %571 = vrot.lane.b32.xlu0 %v568, 64
      %v572 = vpop.permute.xlu0 %571
      %v574 = vmul.f32 %v567, %v572
      %576 = vrot.lane.b32.xlu0 %v574, 32
      %v577 = vpop.permute.xlu0 %576
      %v579 = vadd.f32 %v569, %v577
      %v580 = vtanh.pop %v579
      %582 = vrot.lane.b32.xlu0 %v580, 64
      %v583 = vpop.permute.xlu0 %582
      %v585 = vmul.f32 %v567, %v583
      %587 = vrot.lane.b32.xlu0 %v585, 32
      %v588 = vpop.permute.xlu0 %587
      %v589 = vsel %vm416, %v588, 0
      %591 = vmatpush.msra.mxu0 0.0
      %592 = vmatpush.msra.mxu0 0.0
      %593 = vmatpush.msra.mxu0 0.0
      %594 = vmatpush.msra.mxu0 0.0
      %595 = vmatpush.msra.mxu0 0.0
      %596 = vmatpush.msra.mxu0 0.0
      %597 = vmatpush.msra.mxu0 0.0
      %598 = vmatpush.msra.mxu0 0.0
      %599 = vmatpush.msra.mxu0 0.0
      %600 = vmatpush.msra.mxu0 0.0
      %601 = vmatpush.msra.mxu0 0.0
      %602 = vmatpush.msra.mxu0 0.0
      %603 = vmatpush.msra.mxu0 %v461
      %604 = vmatpush.msra.mxu0 %v460
      %605 = vmatpush.msra.mxu0 %v459
      %606 = vmatpush.msra.mxu0 %v458
      %607 = vmatmul.f32.gmra.mxu0 %v589
      %v608 = vpop.f32.mrf.mxu0
      %v609 = vadd.f32 0.0, %v608
      %610 = vdwg.mxu0
      %v611 = vadd.f32 %v444, %v609
      %v612 = vxor.u32 %v611, 2147483648
      %v613 = vmul.f32 %v612, 1.442695
      %v614 = vpow.pop %v613
      %v615 = vadd.f32 %v614, 1.0
      %v616 = vrcp.pop %v615
      %v617 = vmul.f32 %v615, %v616
      %v618 = vsub.f32 1.0, %v617
      %v619 = vmul.f32 %v616, %v618
      %v620 = vadd.f32 %v616, %v619
      %vm621 = vweird.f32 %v615
      %vm622 = vweird.f32 %v616
      %vm623 = vmor %vm621, %vm622
      %v624 = vsel %vm623, %v616, %v620
      %v625 = vand.u32 2147483647, %v615
      %vm626 = vcmp.eq.f32.partialorder %v625, 8.507059e+37
      %v627 = vand.u32 %v615, 2147483648
      %v628 = vor.u32 1.1754944e-38, %v627
      %v629 = vsel %vm626, %v628, %v624
      %v630 = vmul.f32 1.0, %v629
      %v631 = vtanh.pop %v611
      %v632 = vmul.f32 %v630, %v579
      %634 = vrot.lane.b32.xlu0 %v631, 64
      %v635 = vpop.permute.xlu0 %634
      %v637 = vmul.f32 %v630, %v635
      %639 = vrot.lane.b32.xlu0 %v637, 32
      %v640 = vpop.permute.xlu0 %639
      %v642 = vadd.f32 %v632, %v640
      %v643 = vtanh.pop %v642
      %645 = vrot.lane.b32.xlu0 %v643, 64
      %v646 = vpop.permute.xlu0 %645
      %v648 = vmul.f32 %v630, %v646
      %650 = vrot.lane.b32.xlu0 %v648, 32
      %v651 = vpop.permute.xlu0 %650
      %v652 = vsel %vm416, %v651, 0
      %654 = vmatpush.msra.mxu0 0.0
      %655 = vmatpush.msra.mxu0 0.0
      %656 = vmatpush.msra.mxu0 0.0
      %657 = vmatpush.msra.mxu0 0.0
      %658 = vmatpush.msra.mxu0 0.0
      %659 = vmatpush.msra.mxu0 0.0
      %660 = vmatpush.msra.mxu0 0.0
      %661 = vmatpush.msra.mxu0 0.0
      %662 = vmatpush.msra.mxu0 0.0
      %663 = vmatpush.msra.mxu0 0.0
      %664 = vmatpush.msra.mxu0 0.0
      %665 = vmatpush.msra.mxu0 0.0
      %666 = vmatpush.msra.mxu0 %v461
      %667 = vmatpush.msra.mxu0 %v460
      %668 = vmatpush.msra.mxu0 %v459
      %669 = vmatpush.msra.mxu0 %v458
      %670 = vmatmul.f32.gmra.mxu0 %v652
      %v671 = vpop.f32.mrf.mxu0
      %v672 = vadd.f32 0.0, %v671
      %673 = vdwg.mxu0
      %v674 = vadd.f32 %v446, %v672
      %v675 = vxor.u32 %v674, 2147483648
      %v676 = vmul.f32 %v675, 1.442695
      %v677 = vpow.pop %v676
      %v678 = vadd.f32 %v677, 1.0
      %v679 = vrcp.pop %v678
      %v680 = vmul.f32 %v678, %v679
      %v681 = vsub.f32 1.0, %v680
      %v682 = vmul.f32 %v679, %v681
      %v683 = vadd.f32 %v679, %v682
      %vm684 = vweird.f32 %v678
      %vm685 = vweird.f32 %v679
      %vm686 = vmor %vm684, %vm685
      %v687 = vsel %vm686, %v679, %v683
      %v688 = vand.u32 2147483647, %v678
      %vm689 = vcmp.eq.f32.partialorder %v688, 8.507059e+37
      %v690 = vand.u32 %v678, 2147483648
      %v691 = vor.u32 1.1754944e-38, %v690
      %v692 = vsel %vm689, %v691, %v687
      %v693 = vmul.f32 1.0, %v692
      %v694 = vtanh.pop %v674
      %v695 = vmul.f32 %v693, %v642
      %697 = vrot.lane.b32.xlu0 %v694, 64
      %v698 = vpop.permute.xlu0 %697
      %v700 = vmul.f32 %v693, %v698
      %702 = vrot.lane.b32.xlu0 %v700, 32
      %v703 = vpop.permute.xlu0 %702
      %v705 = vadd.f32 %v695, %v703
      %v706 = vtanh.pop %v705
      %708 = vrot.lane.b32.xlu0 %v706, 64
      %v709 = vpop.permute.xlu0 %708
      %v711 = vmul.f32 %v693, %v709
      %713 = vrot.lane.b32.xlu0 %v711, 32
      %v714 = vpop.permute.xlu0 %713
      %v715 = vsel %vm416, %v714, 0
      %717 = vmatpush.msra.mxu0 0.0
      %718 = vmatpush.msra.mxu0 0.0
      %719 = vmatpush.msra.mxu0 0.0
      %720 = vmatpush.msra.mxu0 0.0
      %721 = vmatpush.msra.mxu0 0.0
      %722 = vmatpush.msra.mxu0 0.0
      %723 = vmatpush.msra.mxu0 0.0
      %724 = vmatpush.msra.mxu0 0.0
      %725 = vmatpush.msra.mxu0 0.0
      %726 = vmatpush.msra.mxu0 0.0
      %727 = vmatpush.msra.mxu0 0.0
      %728 = vmatpush.msra.mxu0 0.0
      %729 = vmatpush.msra.mxu0 %v461
      %730 = vmatpush.msra.mxu0 %v460
      %731 = vmatpush.msra.mxu0 %v459
      %732 = vmatpush.msra.mxu0 %v458
      %733 = vmatmul.f32.gmra.mxu0 %v715
      %v734 = vpop.f32.mrf.mxu0
      %v735 = vadd.f32 0.0, %v734
      %736 = vdwg.mxu0
      %v737 = vadd.f32 %v449, %v735
      %v738 = vxor.u32 %v737, 2147483648
      %v739 = vmul.f32 %v738, 1.442695
      %v740 = vpow.pop %v739
      %v741 = vadd.f32 %v740, 1.0
      %v742 = vrcp.pop %v741
      %v743 = vmul.f32 %v741, %v742
      %v744 = vsub.f32 1.0, %v743
      %v745 = vmul.f32 %v742, %v744
      %v746 = vadd.f32 %v742, %v745
      %vm747 = vweird.f32 %v741
      %vm748 = vweird.f32 %v742
      %vm749 = vmor %vm747, %vm748
      %v750 = vsel %vm749, %v742, %v746
      %v751 = vand.u32 2147483647, %v741
      %vm752 = vcmp.eq.f32.partialorder %v751, 8.507059e+37
      %v753 = vand.u32 %v741, 2147483648
      %v754 = vor.u32 1.1754944e-38, %v753
      %v755 = vsel %vm752, %v754, %v750
      %v756 = vmul.f32 1.0, %v755
      %v757 = vtanh.pop %v737
      %v758 = vmul.f32 %v756, %v705
      %760 = vrot.lane.b32.xlu0 %v757, 64
      %v761 = vpop.permute.xlu0 %760
      %v763 = vmul.f32 %v756, %v761
      %765 = vrot.lane.b32.xlu0 %v763, 32
      %v766 = vpop.permute.xlu0 %765
      %v768 = vadd.f32 %v758, %v766
      %v769 = vtanh.pop %v768
      %771 = vrot.lane.b32.xlu0 %v769, 64
      %v772 = vpop.permute.xlu0 %771
      %v774 = vmul.f32 %v756, %v772
      %776 = vrot.lane.b32.xlu0 %v774, 32
      %v777 = vpop.permute.xlu0 %776
      %v778 = vsel %vm416, %v777, 0
      %780 = vmatpush.msra.mxu0 0.0
      %781 = vmatpush.msra.mxu0 0.0
      %782 = vmatpush.msra.mxu0 0.0
      %783 = vmatpush.msra.mxu0 0.0
      %784 = vmatpush.msra.mxu0 0.0
      %785 = vmatpush.msra.mxu0 0.0
      %786 = vmatpush.msra.mxu0 0.0
      %787 = vmatpush.msra.mxu0 0.0
      %788 = vmatpush.msra.mxu0 0.0
      %789 = vmatpush.msra.mxu0 0.0
      %790 = vmatpush.msra.mxu0 0.0
      %791 = vmatpush.msra.mxu0 0.0
      %792 = vmatpush.msra.mxu0 %v461
      %793 = vmatpush.msra.mxu0 %v460
      %794 = vmatpush.msra.mxu0 %v459
      %795 = vmatpush.msra.mxu0 %v458
      %796 = vmatmul.f32.gmra.mxu0 %v778
      %v797 = vpop.f32.mrf.mxu0
      %v798 = vadd.f32 0.0, %v797
      %799 = vdwg.mxu0
      %v800 = vadd.f32 %v451, %v798
      %v801 = vxor.u32 %v800, 2147483648
      %v802 = vmul.f32 %v801, 1.442695
      %v803 = vpow.pop %v802
      %v804 = vadd.f32 %v803, 1.0
      %v805 = vrcp.pop %v804
      %v806 = vmul.f32 %v804, %v805
      %v807 = vsub.f32 1.0, %v806
      %v808 = vmul.f32 %v805, %v807
      %v809 = vadd.f32 %v805, %v808
      %vm810 = vweird.f32 %v804
      %vm811 = vweird.f32 %v805
      %vm812 = vmor %vm810, %vm811
      %v813 = vsel %vm812, %v805, %v809
      %v814 = vand.u32 2147483647, %v804
      %vm815 = vcmp.eq.f32.partialorder %v814, 8.507059e+37
      %v816 = vand.u32 %v804, 2147483648
      %v817 = vor.u32 1.1754944e-38, %v816
      %v818 = vsel %vm815, %v817, %v813
      %v819 = vmul.f32 1.0, %v818
      %v820 = vtanh.pop %v800
      %v821 = vmul.f32 %v819, %v768
      %823 = vrot.lane.b32.xlu0 %v820, 64
      %v824 = vpop.permute.xlu0 %823
      %v826 = vmul.f32 %v819, %v824
      %828 = vrot.lane.b32.xlu0 %v826, 32
      %v829 = vpop.permute.xlu0 %828
      %v831 = vadd.f32 %v821, %v829
      %v832 = vtanh.pop %v831
      %834 = vrot.lane.b32.xlu0 %v832, 64
      %v835 = vpop.permute.xlu0 %834
      %v837 = vmul.f32 %v819, %v835
      %839 = vrot.lane.b32.xlu0 %v837, 32
      %v840 = vpop.permute.xlu0 %839
      %v841 = vsel %vm416, %v840, 0
      %843 = vmatpush.msra.mxu0 0.0
      %844 = vmatpush.msra.mxu0 0.0
      %845 = vmatpush.msra.mxu0 0.0
      %846 = vmatpush.msra.mxu0 0.0
      %847 = vmatpush.msra.mxu0 0.0
      %848 = vmatpush.msra.mxu0 0.0
      %849 = vmatpush.msra.mxu0 0.0
      %850 = vmatpush.msra.mxu0 0.0
      %851 = vmatpush.msra.mxu0 0.0
      %852 = vmatpush.msra.mxu0 0.0
      %853 = vmatpush.msra.mxu0 0.0
      %854 = vmatpush.msra.mxu0 0.0
      %855 = vmatpush.msra.mxu0 %v461
      %856 = vmatpush.msra.mxu0 %v460
      %857 = vmatpush.msra.mxu0 %v459
      %858 = vmatpush.msra.mxu0 %v458
      %859 = vmatmul.f32.gmra.mxu0 %v841
      %v860 = vpop.f32.mrf.mxu0
      %v861 = vadd.f32 0.0, %v860
      %862 = vdwg.mxu0
      %v863 = vadd.f32 %v454, %v861
      %v864 = vxor.u32 %v863, 2147483648
      %v865 = vmul.f32 %v864, 1.442695
      %v866 = vpow.pop %v865
      %v867 = vadd.f32 %v866, 1.0
      %v868 = vrcp.pop %v867
      %v869 = vmul.f32 %v867, %v868
      %v870 = vsub.f32 1.0, %v869
      %v871 = vmul.f32 %v868, %v870
      %v872 = vadd.f32 %v868, %v871
      %vm873 = vweird.f32 %v867
      %vm874 = vweird.f32 %v868
      %vm875 = vmor %vm873, %vm874
      %v876 = vsel %vm875, %v868, %v872
      %v877 = vand.u32 2147483647, %v867
      %vm878 = vcmp.eq.f32.partialorder %v877, 8.507059e+37
      %v879 = vand.u32 %v867, 2147483648
      %v880 = vor.u32 1.1754944e-38, %v879
      %v881 = vsel %vm878, %v880, %v876
      %v882 = vmul.f32 1.0, %v881
      %v883 = vtanh.pop %v863
      %v884 = vmul.f32 %v882, %v831
      %886 = vrot.lane.b32.xlu0 %v883, 64
      %v887 = vpop.permute.xlu0 %886
      %v889 = vmul.f32 %v882, %v887
      %891 = vrot.lane.b32.xlu0 %v889, 32
      %v892 = vpop.permute.xlu0 %891
      %v894 = vadd.f32 %v884, %v892
      %v895 = vtanh.pop %v894
      %897 = vrot.lane.b32.xlu0 %v895, 64
      %v898 = vpop.permute.xlu0 %897
      %v900 = vmul.f32 %v882, %v898
      %902 = vrot.lane.b32.xlu0 %v900, 32
      %v903 = vpop.permute.xlu0 %902
      %v904 = vsel %vm416, %v903, 0
      %906 = vmatpush.msra.mxu0 0.0
      %907 = vmatpush.msra.mxu0 0.0
      %908 = vmatpush.msra.mxu0 0.0
      %909 = vmatpush.msra.mxu0 0.0
      %910 = vmatpush.msra.mxu0 0.0
      %911 = vmatpush.msra.mxu0 0.0
      %912 = vmatpush.msra.mxu0 0.0
      %913 = vmatpush.msra.mxu0 0.0
      %914 = vmatpush.msra.mxu0 0.0
      %915 = vmatpush.msra.mxu0 0.0
      %916 = vmatpush.msra.mxu0 0.0
      %917 = vmatpush.msra.mxu0 0.0
      %918 = vmatpush.msra.mxu0 %v461
      %919 = vmatpush.msra.mxu0 %v460
      %920 = vmatpush.msra.mxu0 %v459
      %921 = vmatpush.msra.mxu0 %v458
      %922 = vmatmul.f32.gmra.mxu0 %v904
      %v923 = vpop.f32.mrf.mxu0
      %v924 = vadd.f32 0.0, %v923
      %925 = vdwg.mxu0
      %v926 = vadd.f32 %v456, %v924
      %v927 = vxor.u32 %v926, 2147483648
      %v928 = vmul.f32 %v927, 1.442695
      %v929 = vpow.pop %v928
      %v930 = vadd.f32 %v929, 1.0
      %v931 = vrcp.pop %v930
      %v932 = vmul.f32 %v930, %v931
      %v933 = vsub.f32 1.0, %v932
      %v934 = vmul.f32 %v931, %v933
      %v935 = vadd.f32 %v931, %v934
      %vm936 = vweird.f32 %v930
      %vm937 = vweird.f32 %v931
      %vm938 = vmor %vm936, %vm937
      %v939 = vsel %vm938, %v931, %v935
      %v940 = vand.u32 2147483647, %v930
      %vm941 = vcmp.eq.f32.partialorder %v940, 8.507059e+37
      %v942 = vand.u32 %v930, 2147483648
      %v943 = vor.u32 1.1754944e-38, %v942
      %v944 = vsel %vm941, %v943, %v939
      %v945 = vmul.f32 1.0, %v944
      %v946 = vtanh.pop %v926
      %v947 = vmul.f32 %v945, %v894
      %949 = vrot.lane.b32.xlu0 %v946, 64
      %v950 = vpop.permute.xlu0 %949
      %v952 = vmul.f32 %v945, %v950
      %954 = vrot.lane.b32.xlu0 %v952, 32
      %v955 = vpop.permute.xlu0 %954
      %v957 = vadd.f32 %v947, %v955
      %v958 = vtanh.pop %v957
      %960 = vrot.lane.b32.xlu0 %v958, 64
      %v961 = vpop.permute.xlu0 %960
      %v963 = vmul.f32 %v945, %v961
      %v964 = vpack.c.bf16 %v585, %v522
      %v965 = vpack.c.bf16 %v711, %v648
      %v966 = vpack.c.bf16 %v837, %v774
      %v967 = vpack.c.bf16 %v963, %v900
      %v968 = vld [vmem:[%s5] sm:$0xf]
      %v969 = vld [vmem:[%s5 + $0x4] sm:$0xf]
      %v970 = vld [vmem:[%s5 + $0x8] sm:$0xf]
      %v971 = vld [vmem:[%s5 + $0xc] sm:$0xf]
      %v972 = vld [vmem:[%s6] sm:$0x1]
      %v974 = vperm.slane %v972, 0
      %980 = vrot.lane.b32.xlu0 %v964, 32
      %v981 = vpop.permute.xlu0 %980
      %982 = vrot.lane.b32.xlu0 %v965, 32
      %v983 = vpop.permute.xlu0 %982
      %984 = vrot.lane.b32.xlu0 %v966, 32
      %v985 = vpop.permute.xlu0 %984
      %986 = vrot.lane.b32.xlu0 %v967, 32
      %v987 = vpop.permute.xlu0 %986
      %v992 = vunpack.c.l.b16 %v968
      %v993 = vunpack.c.l.b16 %v969
      %v994 = vunpack.c.l.b16 %v970
      %v995 = vunpack.c.l.b16 %v971
      %v996 = vpack.c.b16 %v993, %v992
      %v997 = vpack.c.b16 %v995, %v994
      %v1001 = vsel %vm416, %v981, 0
      %v1004 = vsel %vm416, %v983, 0
      %v1007 = vsel %vm416, %v985, 0
      %v1010 = vsel %vm416, %v987, 0
      %1012 = vmatpush.bf16.msra.mxu0 0
      %1013 = vmatpush.bf16.msra.mxu0 0
      %1014 = vmatpush.bf16.msra.mxu0 0
      %1015 = vmatpush.bf16.msra.mxu0 0
      %1016 = vmatpush.bf16.msra.mxu0 0
      %1017 = vmatpush.bf16.msra.mxu0 0
      %1018 = vmatpush.bf16.msra.mxu0 %v997
      %1019 = vmatpush.bf16.msra.mxu0 %v996
      %1020 = vmatmul.bf16.gmra.mxu0 %v1001
      %v1021 = vpop.f32.mrf.mxu0
      %v1022 = vadd.f32 %v974, %v1021
      %v1023 = vpop.f32.mrf.mxu0
      %v1024 = vadd.f32 %v974, %v1023
      %1025 = vmatmul.bf16.gmra.mxu0 %v1004
      %v1026 = vpop.f32.mrf.mxu0
      %v1027 = vadd.f32 %v974, %v1026
      %v1028 = vpop.f32.mrf.mxu0
      %v1029 = vadd.f32 %v974, %v1028
      %1030 = vmatmul.bf16.gmra.mxu0 %v1007
      %v1031 = vpop.f32.mrf.mxu0
      %v1032 = vadd.f32 %v974, %v1031
      %v1033 = vpop.f32.mrf.mxu0
      %v1034 = vadd.f32 %v974, %v1033
      %1035 = vmatmul.bf16.gmra.mxu0 %v1010
      %v1036 = vpop.f32.mrf.mxu0
      %v1037 = vadd.f32 %v974, %v1036
      %v1038 = vpop.f32.mrf.mxu0
      %v1039 = vadd.f32 %v974, %v1038
      %1040 = vdwg.mxu0
      %v1041 = vxor.u32 %v1022, 2147483648
      %v1042 = vxor.u32 %v1024, 2147483648
      %v1043 = vxor.u32 %v1027, 2147483648
      %v1044 = vxor.u32 %v1029, 2147483648
      %v1045 = vxor.u32 %v1032, 2147483648
      %v1046 = vxor.u32 %v1034, 2147483648
      %v1047 = vxor.u32 %v1037, 2147483648
      %v1048 = vxor.u32 %v1039, 2147483648
      %v1049 = vmul.f32 %v1041, 1.442695
      %v1050 = vpow.pop %v1049
      %v1051 = vmul.f32 %v1042, 1.442695
      %v1052 = vpow.pop %v1051
      %v1053 = vmul.f32 %v1043, 1.442695
      %v1054 = vpow.pop %v1053
      %v1055 = vmul.f32 %v1044, 1.442695
      %v1056 = vpow.pop %v1055
      %v1057 = vmul.f32 %v1045, 1.442695
      %v1058 = vpow.pop %v1057
      %v1059 = vmul.f32 %v1046, 1.442695
      %v1060 = vpow.pop %v1059
      %v1061 = vmul.f32 %v1047, 1.442695
      %v1062 = vpow.pop %v1061
      %v1063 = vmul.f32 %v1048, 1.442695
      %v1064 = vpow.pop %v1063
      %v1065 = vadd.f32 %v1050, 1.0
      %v1066 = vadd.f32 %v1052, 1.0
      %v1067 = vadd.f32 %v1054, 1.0
      %v1068 = vadd.f32 %v1056, 1.0
      %v1069 = vadd.f32 %v1058, 1.0
      %v1070 = vadd.f32 %v1060, 1.0
      %v1071 = vadd.f32 %v1062, 1.0
      %v1072 = vadd.f32 %v1064, 1.0
      %v1073 = vrcp.pop %v1065
      %v1074 = vmul.f32 %v1065, %v1073
      %v1075 = vsub.f32 1.0, %v1074
      %v1076 = vmul.f32 %v1073, %v1075
      %v1077 = vadd.f32 %v1073, %v1076
      %vm1078 = vweird.f32 %v1065
      %vm1079 = vweird.f32 %v1073
      %vm1080 = vmor %vm1078, %vm1079
      %v1081 = vsel %vm1080, %v1073, %v1077
      %v1082 = vand.u32 2147483647, %v1065
      %vm1083 = vcmp.eq.f32.partialorder %v1082, 8.507059e+37
      %v1084 = vand.u32 %v1065, 2147483648
      %v1085 = vor.u32 1.1754944e-38, %v1084
      %v1086 = vsel %vm1083, %v1085, %v1081
      %v1087 = vmul.f32 1.0, %v1086
      %v1088 = vrcp.pop %v1066
      %v1089 = vmul.f32 %v1066, %v1088
      %v1090 = vsub.f32 1.0, %v1089
      %v1091 = vmul.f32 %v1088, %v1090
      %v1092 = vadd.f32 %v1088, %v1091
      %vm1093 = vweird.f32 %v1066
      %vm1094 = vweird.f32 %v1088
      %vm1095 = vmor %vm1093, %vm1094
      %v1096 = vsel %vm1095, %v1088, %v1092
      %v1097 = vand.u32 2147483647, %v1066
      %vm1098 = vcmp.eq.f32.partialorder %v1097, 8.507059e+37
      %v1099 = vand.u32 %v1066, 2147483648
      %v1100 = vor.u32 1.1754944e-38, %v1099
      %v1101 = vsel %vm1098, %v1100, %v1096
      %v1102 = vmul.f32 1.0, %v1101
      %v1103 = vrcp.pop %v1067
      %v1104 = vmul.f32 %v1067, %v1103
      %v1105 = vsub.f32 1.0, %v1104
      %v1106 = vmul.f32 %v1103, %v1105
      %v1107 = vadd.f32 %v1103, %v1106
      %vm1108 = vweird.f32 %v1067
      %vm1109 = vweird.f32 %v1103
      %vm1110 = vmor %vm1108, %vm1109
      %v1111 = vsel %vm1110, %v1103, %v1107
      %v1112 = vand.u32 2147483647, %v1067
      %vm1113 = vcmp.eq.f32.partialorder %v1112, 8.507059e+37
      %v1114 = vand.u32 %v1067, 2147483648
      %v1115 = vor.u32 1.1754944e-38, %v1114
      %v1116 = vsel %vm1113, %v1115, %v1111
      %v1117 = vmul.f32 1.0, %v1116
      %v1118 = vrcp.pop %v1068
      %v1119 = vmul.f32 %v1068, %v1118
      %v1120 = vsub.f32 1.0, %v1119
      %v1121 = vmul.f32 %v1118, %v1120
      %v1122 = vadd.f32 %v1118, %v1121
      %vm1123 = vweird.f32 %v1068
      %vm1124 = vweird.f32 %v1118
      %vm1125 = vmor %vm1123, %vm1124
      %v1126 = vsel %vm1125, %v1118, %v1122
      %v1127 = vand.u32 2147483647, %v1068
      %vm1128 = vcmp.eq.f32.partialorder %v1127, 8.507059e+37
      %v1129 = vand.u32 %v1068, 2147483648
      %v1130 = vor.u32 1.1754944e-38, %v1129
      %v1131 = vsel %vm1128, %v1130, %v1126
      %v1132 = vmul.f32 1.0, %v1131
      %v1133 = vrcp.pop %v1069
      %v1134 = vmul.f32 %v1069, %v1133
      %v1135 = vsub.f32 1.0, %v1134
      %v1136 = vmul.f32 %v1133, %v1135
      %v1137 = vadd.f32 %v1133, %v1136
      %vm1138 = vweird.f32 %v1069
      %vm1139 = vweird.f32 %v1133
      %vm1140 = vmor %vm1138, %vm1139
      %v1141 = vsel %vm1140, %v1133, %v1137
      %v1142 = vand.u32 2147483647, %v1069
      %vm1143 = vcmp.eq.f32.partialorder %v1142, 8.507059e+37
      %v1144 = vand.u32 %v1069, 2147483648
      %v1145 = vor.u32 1.1754944e-38, %v1144
      %v1146 = vsel %vm1143, %v1145, %v1141
      %v1147 = vmul.f32 1.0, %v1146
      %v1148 = vrcp.pop %v1070
      %v1149 = vmul.f32 %v1070, %v1148
      %v1150 = vsub.f32 1.0, %v1149
      %v1151 = vmul.f32 %v1148, %v1150
      %v1152 = vadd.f32 %v1148, %v1151
      %vm1153 = vweird.f32 %v1070
      %vm1154 = vweird.f32 %v1148
      %vm1155 = vmor %vm1153, %vm1154
      %v1156 = vsel %vm1155, %v1148, %v1152
      %v1157 = vand.u32 2147483647, %v1070
      %vm1158 = vcmp.eq.f32.partialorder %v1157, 8.507059e+37
      %v1159 = vand.u32 %v1070, 2147483648
      %v1160 = vor.u32 1.1754944e-38, %v1159
      %v1161 = vsel %vm1158, %v1160, %v1156
      %v1162 = vmul.f32 1.0, %v1161
      %v1163 = vrcp.pop %v1071
      %v1164 = vmul.f32 %v1071, %v1163
      %v1165 = vsub.f32 1.0, %v1164
      %v1166 = vmul.f32 %v1163, %v1165
      %v1167 = vadd.f32 %v1163, %v1166
      %vm1168 = vweird.f32 %v1071
      %vm1169 = vweird.f32 %v1163
      %vm1170 = vmor %vm1168, %vm1169
      %v1171 = vsel %vm1170, %v1163, %v1167
      %v1172 = vand.u32 2147483647, %v1071
      %vm1173 = vcmp.eq.f32.partialorder %v1172, 8.507059e+37
      %v1174 = vand.u32 %v1071, 2147483648
      %v1175 = vor.u32 1.1754944e-38, %v1174
      %v1176 = vsel %vm1173, %v1175, %v1171
      %v1177 = vmul.f32 1.0, %v1176
      %v1178 = vrcp.pop %v1072
      %v1179 = vmul.f32 %v1072, %v1178
      %v1180 = vsub.f32 1.0, %v1179
      %v1181 = vmul.f32 %v1178, %v1180
      %v1182 = vadd.f32 %v1178, %v1181
      %vm1183 = vweird.f32 %v1072
      %vm1184 = vweird.f32 %v1178
      %vm1185 = vmor %vm1183, %vm1184
      %v1186 = vsel %vm1185, %v1178, %v1182
      %v1187 = vand.u32 2147483647, %v1072
      %vm1188 = vcmp.eq.f32.partialorder %v1187, 8.507059e+37
      %v1189 = vand.u32 %v1072, 2147483648
      %v1190 = vor.u32 1.1754944e-38, %v1189
      %v1191 = vsel %vm1188, %v1190, %v1186
      %v1192 = vmul.f32 1.0, %v1191
      %v1193 = vmul.f32 %v1087, 0.99
      %v1194 = vmul.f32 %v1102, 0.99
      %v1195 = vmul.f32 %v1117, 0.99
      %v1196 = vmul.f32 %v1132, 0.99
      %v1197 = vmul.f32 %v1147, 0.99
      %v1198 = vmul.f32 %v1162, 0.99
      %v1199 = vmul.f32 %v1177, 0.99
      %v1200 = vmul.f32 %v1192, 0.99
      %v1201 = vmax.f32 %v1193, 1e-10
      %v1202 = vmax.f32 %v1194, 1e-10
      %v1203 = vmax.f32 %v1195, 1e-10
      %v1204 = vmax.f32 %v1196, 1e-10
      %v1205 = vmax.f32 %v1197, 1e-10
      %v1206 = vmax.f32 %v1198, 1e-10
      %v1207 = vmax.f32 %v1199, 1e-10
      %v1208 = vmax.f32 %v1200, 1e-10
      %v1209 = vlaneseq
      %v1210 = vshrl.u32 %v1209, 7
      %v1211 = vadd.s32 %v1210, 8
      %v1212 = vadd.s32 %v1210, 16
      %v1213 = vadd.s32 %v1210, 24
      %v1214 = vadd.s32 %v1210, 32
      %v1215 = vadd.s32 %v1210, 40
      %v1216 = vadd.s32 %v1210, 48
      %v1217 = vadd.s32 %v1210, 56
      %vm1218 = vcmp.lt.s32.totalorder %v1210, 16
      %vm1219 = vcmp.lt.s32.totalorder %v1211, 16
      %vm1220 = vcmp.lt.s32.totalorder %v1212, 16
      %vm1221 = vcmp.lt.s32.totalorder %v1213, 16
      %vm1222 = vcmp.lt.s32.totalorder %v1214, 16
      %vm1223 = vcmp.lt.s32.totalorder %v1215, 16
      %vm1224 = vcmp.lt.s32.totalorder %v1216, 16
      %vm1225 = vcmp.lt.s32.totalorder %v1217, 16
      %v1226 = vsel %vm1218, 1.0, %v1201
      %v1227 = vsel %vm1219, 1.0, %v1202
      %v1228 = vsel %vm1220, 1.0, %v1203
      %v1229 = vsel %vm1221, 1.0, %v1204
      %v1230 = vsel %vm1222, 1.0, %v1205
      %v1231 = vsel %vm1223, 1.0, %v1206
      %v1232 = vsel %vm1224, 1.0, %v1207
      %v1233 = vsel %vm1225, 1.0, %v1208
      %v1234 = vlog2.pop %v1226
      %v1235 = vmul.f32 %v1234, 0.6931472
      %v1236 = vlog2.pop %v1227
      %v1237 = vmul.f32 %v1236, 0.6931472
      %v1238 = vlog2.pop %v1228
      %v1239 = vmul.f32 %v1238, 0.6931472
      %v1240 = vlog2.pop %v1229
      %v1241 = vmul.f32 %v1240, 0.6931472
      %v1242 = vlog2.pop %v1230
      %v1243 = vmul.f32 %v1242, 0.6931472
      %v1244 = vlog2.pop %v1231
      %v1245 = vmul.f32 %v1244, 0.6931472
      %v1246 = vlog2.pop %v1232
      %v1247 = vmul.f32 %v1246, 0.6931472
      %v1248 = vlog2.pop %v1233
      %v1249 = vmul.f32 %v1248, 0.6931472
      %1257 = vrot.lane.b32.xlu0 %v1235, 127
      %v1258 = vpop.permute.xlu0 %1257
      %1259 = vrot.lane.b32.xlu0 %v1237, 127
      %v1260 = vpop.permute.xlu0 %1259
      %1261 = vrot.lane.b32.xlu0 %v1239, 127
      %v1262 = vpop.permute.xlu0 %1261
      %1263 = vrot.lane.b32.xlu0 %v1241, 127
      %v1264 = vpop.permute.xlu0 %1263
      %1265 = vrot.lane.b32.xlu0 %v1243, 127
      %v1266 = vpop.permute.xlu0 %1265
      %1267 = vrot.lane.b32.xlu0 %v1245, 127
      %v1268 = vpop.permute.xlu0 %1267
      %1269 = vrot.lane.b32.xlu0 %v1247, 127
      %v1270 = vpop.permute.xlu0 %1269
      %1271 = vrot.lane.b32.xlu0 0.0, 1
      %v1272 = vpop.permute.xlu0 %1271
      %1273 = vrot.lane.b32.xlu0 %v1258, 1
      %v1274 = vpop.permute.xlu0 %1273
      %1275 = vrot.lane.b32.xlu0 %v1260, 1
      %v1276 = vpop.permute.xlu0 %1275
      %1277 = vrot.lane.b32.xlu0 %v1262, 1
      %v1278 = vpop.permute.xlu0 %1277
      %1279 = vrot.lane.b32.xlu0 %v1264, 1
      %v1280 = vpop.permute.xlu0 %1279
      %1281 = vrot.lane.b32.xlu0 %v1266, 1
      %v1282 = vpop.permute.xlu0 %1281
      %1283 = vrot.lane.b32.xlu0 %v1268, 1
      %v1284 = vpop.permute.xlu0 %1283
      %1285 = vrot.lane.b32.xlu0 %v1270, 1
      %v1286 = vpop.permute.xlu0 %1285
      %v1295 = vadd.f32 %v1235, %v1272
      %v1296 = vadd.f32 %v1237, %v1274
      %v1297 = vadd.f32 %v1239, %v1276
      %v1298 = vadd.f32 %v1241, %v1278
      %v1299 = vadd.f32 %v1243, %v1280
      %v1300 = vadd.f32 %v1245, %v1282
      %v1301 = vadd.f32 %v1247, %v1284
      %v1302 = vadd.f32 %v1249, %v1286
      %1309 = vrot.lane.b32.xlu0 %v1295, 127
      %v1310 = vpop.permute.xlu0 %1309
      %1311 = vrot.lane.b32.xlu0 %v1296, 127
      %v1312 = vpop.permute.xlu0 %1311
      %1313 = vrot.lane.b32.xlu0 %v1297, 127
      %v1314 = vpop.permute.xlu0 %1313
      %1315 = vrot.lane.b32.xlu0 %v1298, 127
      %v1316 = vpop.permute.xlu0 %1315
      %1317 = vrot.lane.b32.xlu0 %v1299, 127
      %v1318 = vpop.permute.xlu0 %1317
      %1319 = vrot.lane.b32.xlu0 %v1300, 127
      %v1320 = vpop.permute.xlu0 %1319
      %1321 = vrot.lane.b32.xlu0 %v1310, 1
      %v1322 = vpop.permute.xlu0 %1321
      %1323 = vrot.lane.b32.xlu0 %v1312, 1
      %v1324 = vpop.permute.xlu0 %1323
      %1325 = vrot.lane.b32.xlu0 %v1314, 1
      %v1326 = vpop.permute.xlu0 %1325
      %1327 = vrot.lane.b32.xlu0 %v1316, 1
      %v1328 = vpop.permute.xlu0 %1327
      %1329 = vrot.lane.b32.xlu0 %v1318, 1
      %v1330 = vpop.permute.xlu0 %1329
      %1331 = vrot.lane.b32.xlu0 %v1320, 1
      %v1332 = vpop.permute.xlu0 %1331
      %v1339 = vadd.f32 %v1295, %v1272
      %v1340 = vadd.f32 %v1296, %v1272
      %v1341 = vadd.f32 %v1297, %v1322
      %v1342 = vadd.f32 %v1298, %v1324
      %v1343 = vadd.f32 %v1299, %v1326
      %v1344 = vadd.f32 %v1300, %v1328
      %v1345 = vadd.f32 %v1301, %v1330
      %v1346 = vadd.f32 %v1302, %v1332
      %1351 = vrot.lane.b32.xlu0 %v1339, 127
      %v1352 = vpop.permute.xlu0 %1351
      %1353 = vrot.lane.b32.xlu0 %v1340, 127
      %v1354 = vpop.permute.xlu0 %1353
      %1355 = vrot.lane.b32.xlu0 %v1341, 127
      %v1356 = vpop.permute.xlu0 %1355
      %1357 = vrot.lane.b32.xlu0 %v1342, 127
      %v1358 = vpop.permute.xlu0 %1357
      %1359 = vrot.lane.b32.xlu0 %v1352, 1
      %v1360 = vpop.permute.xlu0 %1359
      %1361 = vrot.lane.b32.xlu0 %v1354, 1
      %v1362 = vpop.permute.xlu0 %1361
      %1363 = vrot.lane.b32.xlu0 %v1356, 1
      %v1364 = vpop.permute.xlu0 %1363
      %1365 = vrot.lane.b32.xlu0 %v1358, 1
      %v1366 = vpop.permute.xlu0 %1365
      %v1371 = vadd.f32 %v1339, %v1272
      %v1372 = vadd.f32 %v1340, %v1272
      %v1373 = vadd.f32 %v1341, %v1272
      %v1374 = vadd.f32 %v1342, %v1272
      %v1375 = vadd.f32 %v1343, %v1360
      %v1376 = vadd.f32 %v1344, %v1362
      %v1377 = vadd.f32 %v1345, %v1364
      %v1378 = vadd.f32 %v1346, %v1366
      %v1379 = vmul.f32 %v1371, 1.442695
      %v1380 = vpow.pop %v1379
      %v1381 = vmul.f32 %v1372, 1.442695
      %v1382 = vpow.pop %v1381
      %v1383 = vmul.f32 %v1373, 1.442695
      %v1384 = vpow.pop %v1383
      %v1385 = vmul.f32 %v1374, 1.442695
      %v1386 = vpow.pop %v1385
      %v1387 = vmul.f32 %v1375, 1.442695
      %v1388 = vpow.pop %v1387
      %v1389 = vmul.f32 %v1376, 1.442695
      %v1390 = vpow.pop %v1389
      %v1391 = vmul.f32 %v1377, 1.442695
      %v1392 = vpow.pop %v1391
      %v1393 = vmul.f32 %v1378, 1.442695
      %v1394 = vpow.pop %v1393
      %v1395 = vsub.f32 1.0, %v1380
      %v1396 = vsub.f32 1.0, %v1382
      %v1397 = vsub.f32 1.0, %v1384
      %v1398 = vsub.f32 1.0, %v1386
      %v1399 = vsub.f32 1.0, %v1388
      %v1400 = vsub.f32 1.0, %v1390
      %v1401 = vsub.f32 1.0, %v1392
      %v1402 = vsub.f32 1.0, %v1394
      %vm1403 = vcmp.eq.s32.totalorder %v289, 1
      %v1404 = vsel %vm1403, -1e+30, %v1022
      %v1405 = vsel %vm1403, -1e+30, %v1024
      %v1406 = vsel %vm1403, -1e+30, %v1027
      %v1407 = vsel %vm1403, -1e+30, %v1029
      %v1408 = vsel %vm1403, -1e+30, %v1032
      %v1409 = vsel %vm1403, -1e+30, %v1034
      %v1410 = vsel %vm1403, -1e+30, %v1037
      %v1411 = vsel %vm1403, -1e+30, %v1039
      %v1412 = vsel %vm350, %v1404, -inf
      %1413 = vmax.xlane.f32.xlu0 %v1412
      %v1414 = vpop.xlane.xlu0 %1413
      %v1415 = vsel %vm350, %v1405, -inf
      %1416 = vmax.xlane.f32.xlu0 %v1415
      %v1417 = vpop.xlane.xlu0 %1416
      %v1418 = vsel %vm350, %v1406, -inf
      %1419 = vmax.xlane.f32.xlu0 %v1418
      %v1420 = vpop.xlane.xlu0 %1419
      %v1421 = vsel %vm350, %v1407, -inf
      %1422 = vmax.xlane.f32.xlu0 %v1421
      %v1423 = vpop.xlane.xlu0 %1422
      %v1424 = vsel %vm350, %v1408, -inf
      %1425 = vmax.xlane.f32.xlu0 %v1424
      %v1426 = vpop.xlane.xlu0 %1425
      %v1427 = vsel %vm350, %v1409, -inf
      %1428 = vmax.xlane.f32.xlu0 %v1427
      %v1429 = vpop.xlane.xlu0 %1428
      %v1430 = vsel %vm350, %v1410, -inf
      %1431 = vmax.xlane.f32.xlu0 %v1430
      %v1432 = vpop.xlane.xlu0 %1431
      %v1433 = vsel %vm350, %v1411, -inf
      %1434 = vmax.xlane.f32.xlu0 %v1433
      %v1435 = vpop.xlane.xlu0 %1434
      %v1436 = vsub.f32 %v1404, %v1414
      %v1437 = vsub.f32 %v1405, %v1417
      %v1438 = vsub.f32 %v1406, %v1420
      %v1439 = vsub.f32 %v1407, %v1423
      %v1440 = vsub.f32 %v1408, %v1426
      %v1441 = vsub.f32 %v1409, %v1429
      %v1442 = vsub.f32 %v1410, %v1432
      %v1443 = vsub.f32 %v1411, %v1435
      %v1444 = vmul.f32 %v1436, 1.442695
      %v1445 = vpow.pop %v1444
      %v1446 = vmul.f32 %v1437, 1.442695
      %v1447 = vpow.pop %v1446
      %v1448 = vmul.f32 %v1438, 1.442695
      %v1449 = vpow.pop %v1448
      %v1450 = vmul.f32 %v1439, 1.442695
      %v1451 = vpow.pop %v1450
      %v1452 = vmul.f32 %v1440, 1.442695
      %v1453 = vpow.pop %v1452
      %v1454 = vmul.f32 %v1441, 1.442695
      %v1455 = vpow.pop %v1454
      %v1456 = vmul.f32 %v1442, 1.442695
      %v1457 = vpow.pop %v1456
      %v1458 = vmul.f32 %v1443, 1.442695
      %v1459 = vpow.pop %v1458
      %v1460 = vsel %vm1403, 0.0, %v1445
      %v1461 = vsel %vm1403, 0.0, %v1447
      %v1462 = vsel %vm1403, 0.0, %v1449
      %v1463 = vsel %vm1403, 0.0, %v1451
      %v1464 = vsel %vm1403, 0.0, %v1453
      %v1465 = vsel %vm1403, 0.0, %v1455
      %v1466 = vsel %vm1403, 0.0, %v1457
      %v1467 = vsel %vm1403, 0.0, %v1459
      %v1468 = vsel %vm350, %v1460, 0.0
      %1469 = vadd.xlane.f32.xlu0 %v1468
      %v1470 = vpop.xlane.xlu0 %1469
      %v1471 = vsel %vm350, %v1461, 0.0
      %1472 = vadd.xlane.f32.xlu0 %v1471
      %v1473 = vpop.xlane.xlu0 %1472
      %v1474 = vsel %vm350, %v1462, 0.0
      %1475 = vadd.xlane.f32.xlu0 %v1474
      %v1476 = vpop.xlane.xlu0 %1475
      %v1477 = vsel %vm350, %v1463, 0.0
      %1478 = vadd.xlane.f32.xlu0 %v1477
      %v1479 = vpop.xlane.xlu0 %1478
      %v1480 = vsel %vm350, %v1464, 0.0
      %1481 = vadd.xlane.f32.xlu0 %v1480
      %v1482 = vpop.xlane.xlu0 %1481
      %v1483 = vsel %vm350, %v1465, 0.0
      %1484 = vadd.xlane.f32.xlu0 %v1483
      %v1485 = vpop.xlane.xlu0 %1484
      %v1486 = vsel %vm350, %v1466, 0.0
      %1487 = vadd.xlane.f32.xlu0 %v1486
      %v1488 = vpop.xlane.xlu0 %1487
      %v1489 = vsel %vm350, %v1467, 0.0
      %1490 = vadd.xlane.f32.xlu0 %v1489
      %v1491 = vpop.xlane.xlu0 %1490
      %v1492 = vrcp.pop %v1470
      %v1493 = vmul.f32 %v1470, %v1492
      %v1494 = vsub.f32 1.0, %v1493
      %v1495 = vmul.f32 %v1492, %v1494
      %v1496 = vadd.f32 %v1492, %v1495
      %vm1497 = vweird.f32 %v1470
      %vm1498 = vweird.f32 %v1492
      %vm1499 = vmor %vm1497, %vm1498
      %v1500 = vsel %vm1499, %v1492, %v1496
      %v1501 = vand.u32 2147483647, %v1470
      %vm1502 = vcmp.eq.f32.partialorder %v1501, 8.507059e+37
      %v1503 = vand.u32 %v1470, 2147483648
      %v1504 = vor.u32 1.1754944e-38, %v1503
      %v1505 = vsel %vm1502, %v1504, %v1500
      %v1506 = vmul.f32 %v1460, %v1505
      %v1507 = vrcp.pop %v1473
      %v1508 = vmul.f32 %v1473, %v1507
      %v1509 = vsub.f32 1.0, %v1508
      %v1510 = vmul.f32 %v1507, %v1509
      %v1511 = vadd.f32 %v1507, %v1510
      %vm1512 = vweird.f32 %v1473
      %vm1513 = vweird.f32 %v1507
      %vm1514 = vmor %vm1512, %vm1513
      %v1515 = vsel %vm1514, %v1507, %v1511
      %v1516 = vand.u32 2147483647, %v1473
      %vm1517 = vcmp.eq.f32.partialorder %v1516, 8.507059e+37
      %v1518 = vand.u32 %v1473, 2147483648
      %v1519 = vor.u32 1.1754944e-38, %v1518
      %v1520 = vsel %vm1517, %v1519, %v1515
      %v1521 = vmul.f32 %v1461, %v1520
      %v1522 = vrcp.pop %v1476
      %v1523 = vmul.f32 %v1476, %v1522
      %v1524 = vsub.f32 1.0, %v1523
      %v1525 = vmul.f32 %v1522, %v1524
      %v1526 = vadd.f32 %v1522, %v1525
      %vm1527 = vweird.f32 %v1476
      %vm1528 = vweird.f32 %v1522
      %vm1529 = vmor %vm1527, %vm1528
      %v1530 = vsel %vm1529, %v1522, %v1526
      %v1531 = vand.u32 2147483647, %v1476
      %vm1532 = vcmp.eq.f32.partialorder %v1531, 8.507059e+37
      %v1533 = vand.u32 %v1476, 2147483648
      %v1534 = vor.u32 1.1754944e-38, %v1533
      %v1535 = vsel %vm1532, %v1534, %v1530
      %v1536 = vmul.f32 %v1462, %v1535
      %v1537 = vrcp.pop %v1479
      %v1538 = vmul.f32 %v1479, %v1537
      %v1539 = vsub.f32 1.0, %v1538
      %v1540 = vmul.f32 %v1537, %v1539
      %v1541 = vadd.f32 %v1537, %v1540
      %vm1542 = vweird.f32 %v1479
      %vm1543 = vweird.f32 %v1537
      %vm1544 = vmor %vm1542, %vm1543
      %v1545 = vsel %vm1544, %v1537, %v1541
      %v1546 = vand.u32 2147483647, %v1479
      %vm1547 = vcmp.eq.f32.partialorder %v1546, 8.507059e+37
      %v1548 = vand.u32 %v1479, 2147483648
      %v1549 = vor.u32 1.1754944e-38, %v1548
      %v1550 = vsel %vm1547, %v1549, %v1545
      %v1551 = vmul.f32 %v1463, %v1550
      %v1552 = vrcp.pop %v1482
      %v1553 = vmul.f32 %v1482, %v1552
      %v1554 = vsub.f32 1.0, %v1553
      %v1555 = vmul.f32 %v1552, %v1554
      %v1556 = vadd.f32 %v1552, %v1555
      %vm1557 = vweird.f32 %v1482
      %vm1558 = vweird.f32 %v1552
      %vm1559 = vmor %vm1557, %vm1558
      %v1560 = vsel %vm1559, %v1552, %v1556
      %v1561 = vand.u32 2147483647, %v1482
      %vm1562 = vcmp.eq.f32.partialorder %v1561, 8.507059e+37
      %v1563 = vand.u32 %v1482, 2147483648
      %v1564 = vor.u32 1.1754944e-38, %v1563
      %v1565 = vsel %vm1562, %v1564, %v1560
      %v1566 = vmul.f32 %v1464, %v1565
      %v1567 = vrcp.pop %v1485
      %v1568 = vmul.f32 %v1485, %v1567
      %v1569 = vsub.f32 1.0, %v1568
      %v1570 = vmul.f32 %v1567, %v1569
      %v1571 = vadd.f32 %v1567, %v1570
      %vm1572 = vweird.f32 %v1485
      %vm1573 = vweird.f32 %v1567
      %vm1574 = vmor %vm1572, %vm1573
      %v1575 = vsel %vm1574, %v1567, %v1571
      %v1576 = vand.u32 2147483647, %v1485
      %vm1577 = vcmp.eq.f32.partialorder %v1576, 8.507059e+37
      %v1578 = vand.u32 %v1485, 2147483648
      %v1579 = vor.u32 1.1754944e-38, %v1578
      %v1580 = vsel %vm1577, %v1579, %v1575
      %v1581 = vmul.f32 %v1465, %v1580
      %v1582 = vrcp.pop %v1488
      %v1583 = vmul.f32 %v1488, %v1582
      %v1584 = vsub.f32 1.0, %v1583
      %v1585 = vmul.f32 %v1582, %v1584
      %v1586 = vadd.f32 %v1582, %v1585
      %vm1587 = vweird.f32 %v1488
      %vm1588 = vweird.f32 %v1582
      %vm1589 = vmor %vm1587, %vm1588
      %v1590 = vsel %vm1589, %v1582, %v1586
      %v1591 = vand.u32 2147483647, %v1488
      %vm1592 = vcmp.eq.f32.partialorder %v1591, 8.507059e+37
      %v1593 = vand.u32 %v1488, 2147483648
      %v1594 = vor.u32 1.1754944e-38, %v1593
      %v1595 = vsel %vm1592, %v1594, %v1590
      %v1596 = vmul.f32 %v1466, %v1595
      %v1597 = vrcp.pop %v1491
      %v1598 = vmul.f32 %v1491, %v1597
      %v1599 = vsub.f32 1.0, %v1598
      %v1600 = vmul.f32 %v1597, %v1599
      %v1601 = vadd.f32 %v1597, %v1600
      %vm1602 = vweird.f32 %v1491
      %vm1603 = vweird.f32 %v1597
      %vm1604 = vmor %vm1602, %vm1603
      %v1605 = vsel %vm1604, %v1597, %v1601
      %v1606 = vand.u32 2147483647, %v1491
      %vm1607 = vcmp.eq.f32.partialorder %v1606, 8.507059e+37
      %v1608 = vand.u32 %v1491, 2147483648
      %v1609 = vor.u32 1.1754944e-38, %v1608
      %v1610 = vsel %vm1607, %v1609, %v1605
      %v1611 = vmul.f32 %v1467, %v1610
      %1613 = vset.pattern.permute.xlu0 1
      %1614 = vperm.xlu0 %1613, %v1380
      %v1615 = vpop.permute.xlu0 %1614
      %1618 = vset.pattern.permute.xlu0 1
      %1619 = vperm.xlu0 %1618, %v1382
      %v1620 = vpop.permute.xlu0 %1619
      %1623 = vset.pattern.permute.xlu0 1
      %1624 = vperm.xlu0 %1623, %v1384
      %v1625 = vpop.permute.xlu0 %1624
      %1628 = vset.pattern.permute.xlu0 1
      %1629 = vperm.xlu0 %1628, %v1386
      %v1630 = vpop.permute.xlu0 %1629
      %1633 = vset.pattern.permute.xlu0 1
      %1634 = vperm.xlu0 %1633, %v1388
      %v1635 = vpop.permute.xlu0 %1634
      %1638 = vset.pattern.permute.xlu0 1
      %1639 = vperm.xlu0 %1638, %v1390
      %v1640 = vpop.permute.xlu0 %1639
      %1643 = vset.pattern.permute.xlu0 1
      %1644 = vperm.xlu0 %1643, %v1392
      %v1645 = vpop.permute.xlu0 %1644
      %1648 = vset.pattern.permute.xlu0 1
      %1649 = vperm.xlu0 %1648, %v1394
      %v1650 = vpop.permute.xlu0 %1649
      %v1652 = vmul.f32 %v1615, %v1506
      %v1653 = vmul.f32 %v1620, %v1521
      %v1654 = vmul.f32 %v1625, %v1536
      %v1655 = vmul.f32 %v1630, %v1551
      %v1656 = vmul.f32 %v1635, %v1566
      %v1657 = vmul.f32 %v1640, %v1581
      %v1658 = vmul.f32 %v1645, %v1596
      %v1659 = vmul.f32 %v1650, %v1611
      %1661 = vset.pattern.permute.xlu0 1
      %1662 = vperm.xlu0 %1661, %v1395
      %v1663 = vpop.permute.xlu0 %1662
      %1666 = vset.pattern.permute.xlu0 1
      %1667 = vperm.xlu0 %1666, %v1396
      %v1668 = vpop.permute.xlu0 %1667
      %1671 = vset.pattern.permute.xlu0 1
      %1672 = vperm.xlu0 %1671, %v1397
      %v1673 = vpop.permute.xlu0 %1672
      %1676 = vset.pattern.permute.xlu0 1
      %1677 = vperm.xlu0 %1676, %v1398
      %v1678 = vpop.permute.xlu0 %1677
      %1681 = vset.pattern.permute.xlu0 1
      %1682 = vperm.xlu0 %1681, %v1399
      %v1683 = vpop.permute.xlu0 %1682
      %1686 = vset.pattern.permute.xlu0 1
      %1687 = vperm.xlu0 %1686, %v1400
      %v1688 = vpop.permute.xlu0 %1687
      %1691 = vset.pattern.permute.xlu0 1
      %1692 = vperm.xlu0 %1691, %v1401
      %v1693 = vpop.permute.xlu0 %1692
      %1696 = vset.pattern.permute.xlu0 1
      %1697 = vperm.xlu0 %1696, %v1402
      %v1698 = vpop.permute.xlu0 %1697
      %v1700 = vsel %vm1403, %v1663, %v1652
      %v1701 = vsel %vm1403, %v1668, %v1653
      %v1702 = vsel %vm1403, %v1673, %v1654
      %v1703 = vsel %vm1403, %v1678, %v1655
      %v1704 = vsel %vm1403, %v1683, %v1656
      %v1705 = vsel %vm1403, %v1688, %v1657
      %v1706 = vsel %vm1403, %v1693, %v1658
      %v1707 = vsel %vm1403, %v1698, %v1659
      %v1708 = vmax.f32 %v1700, 1e-10
      %v1709 = vmax.f32 %v1701, 1e-10
      %v1710 = vmax.f32 %v1702, 1e-10
      %v1711 = vmax.f32 %v1703, 1e-10
      %v1712 = vmax.f32 %v1704, 1e-10
      %v1713 = vmax.f32 %v1705, 1e-10
      %v1714 = vmax.f32 %v1706, 1e-10
      %v1715 = vmax.f32 %v1707, 1e-10
      %v1716 = vsel %vm350, %v1708, 0.0
      %1717 = vadd.xlane.f32.xlu0 %v1716
      %v1718 = vpop.xlane.xlu0 %1717
      %v1719 = vsel %vm350, %v1709, 0.0
      %1720 = vadd.xlane.f32.xlu0 %v1719
      %v1721 = vpop.xlane.xlu0 %1720
      %v1722 = vsel %vm350, %v1710, 0.0
      %1723 = vadd.xlane.f32.xlu0 %v1722
      %v1724 = vpop.xlane.xlu0 %1723
      %v1725 = vsel %vm350, %v1711, 0.0
      %1726 = vadd.xlane.f32.xlu0 %v1725
      %v1727 = vpop.xlane.xlu0 %1726
      %v1728 = vsel %vm350, %v1712, 0.0
      %1729 = vadd.xlane.f32.xlu0 %v1728
      %v1730 = vpop.xlane.xlu0 %1729
      %v1731 = vsel %vm350, %v1713, 0.0
      %1732 = vadd.xlane.f32.xlu0 %v1731
      %v1733 = vpop.xlane.xlu0 %1732
      %v1734 = vsel %vm350, %v1714, 0.0
      %1735 = vadd.xlane.f32.xlu0 %v1734
      %v1736 = vpop.xlane.xlu0 %1735
      %v1737 = vsel %vm350, %v1715, 0.0
      %1738 = vadd.xlane.f32.xlu0 %v1737
      %v1739 = vpop.xlane.xlu0 %1738
      %v1740 = vlog2.pop %v1718
      %v1741 = vmul.f32 %v1740, 0.6931472
      %v1742 = vlog2.pop %v1721
      %v1743 = vmul.f32 %v1742, 0.6931472
      %v1744 = vlog2.pop %v1724
      %v1745 = vmul.f32 %v1744, 0.6931472
      %v1746 = vlog2.pop %v1727
      %v1747 = vmul.f32 %v1746, 0.6931472
      %v1748 = vlog2.pop %v1730
      %v1749 = vmul.f32 %v1748, 0.6931472
      %v1750 = vlog2.pop %v1733
      %v1751 = vmul.f32 %v1750, 0.6931472
      %v1752 = vlog2.pop %v1736
      %v1753 = vmul.f32 %v1752, 0.6931472
      %v1754 = vlog2.pop %v1739
      %v1755 = vmul.f32 %v1754, 0.6931472
      %v1756 = vlog2.pop %v1708
      %v1757 = vmul.f32 %v1756, 0.6931472
      %v1758 = vlog2.pop %v1709
      %v1759 = vmul.f32 %v1758, 0.6931472
      %v1760 = vlog2.pop %v1710
      %v1761 = vmul.f32 %v1760, 0.6931472
      %v1762 = vlog2.pop %v1711
      %v1763 = vmul.f32 %v1762, 0.6931472
      %v1764 = vlog2.pop %v1712
      %v1765 = vmul.f32 %v1764, 0.6931472
      %v1766 = vlog2.pop %v1713
      %v1767 = vmul.f32 %v1766, 0.6931472
      %v1768 = vlog2.pop %v1714
      %v1769 = vmul.f32 %v1768, 0.6931472
      %v1770 = vlog2.pop %v1715
      %v1771 = vmul.f32 %v1770, 0.6931472
      %v1772 = vsub.f32 %v1757, %v1741
      %v1773 = vsub.f32 %v1759, %v1743
      %v1774 = vsub.f32 %v1761, %v1745
      %v1775 = vsub.f32 %v1763, %v1747
      %v1776 = vsub.f32 %v1765, %v1749
      %v1777 = vsub.f32 %v1767, %v1751
      %v1778 = vsub.f32 %v1769, %v1753
      %v1779 = vsub.f32 %v1771, %v1755
      %v1780 = vmax.f32 %v1395, 1e-10
      %v1781 = vmax.f32 %v1396, 1e-10
      %v1782 = vmax.f32 %v1397, 1e-10
      %v1783 = vmax.f32 %v1398, 1e-10
      %v1784 = vmax.f32 %v1399, 1e-10
      %v1785 = vmax.f32 %v1400, 1e-10
      %v1786 = vmax.f32 %v1401, 1e-10
      %v1787 = vmax.f32 %v1402, 1e-10
      %v1788 = vlog2.pop %v1780
      %v1789 = vmul.f32 %v1788, 0.6931472
      %v1790 = vlog2.pop %v1781
      %v1791 = vmul.f32 %v1790, 0.6931472
      %v1792 = vlog2.pop %v1782
      %v1793 = vmul.f32 %v1792, 0.6931472
      %v1794 = vlog2.pop %v1783
      %v1795 = vmul.f32 %v1794, 0.6931472
      %v1796 = vlog2.pop %v1784
      %v1797 = vmul.f32 %v1796, 0.6931472
      %v1798 = vlog2.pop %v1785
      %v1799 = vmul.f32 %v1798, 0.6931472
      %v1800 = vlog2.pop %v1786
      %v1801 = vmul.f32 %v1800, 0.6931472
      %v1802 = vlog2.pop %v1787
      %v1803 = vmul.f32 %v1802, 0.6931472
      %v1804 = vsub.f32 %v1789, %v1741
      %v1805 = vsub.f32 %v1791, %v1743
      %v1806 = vsub.f32 %v1793, %v1745
      %v1807 = vsub.f32 %v1795, %v1747
      %v1808 = vsub.f32 %v1797, %v1749
      %v1809 = vsub.f32 %v1799, %v1751
      %v1810 = vsub.f32 %v1801, %v1753
      %v1811 = vsub.f32 %v1803, %v1755
      %1820 = vrot.lane.b32.xlu0 %v1772, 127
      %v1821 = vpop.permute.xlu0 %1820
      %1822 = vrot.lane.b32.xlu0 %v1773, 127
      %v1823 = vpop.permute.xlu0 %1822
      %1824 = vrot.lane.b32.xlu0 %v1774, 127
      %v1825 = vpop.permute.xlu0 %1824
      %1826 = vrot.lane.b32.xlu0 %v1775, 127
      %v1827 = vpop.permute.xlu0 %1826
      %1828 = vrot.lane.b32.xlu0 %v1776, 127
      %v1829 = vpop.permute.xlu0 %1828
      %1830 = vrot.lane.b32.xlu0 %v1777, 127
      %v1831 = vpop.permute.xlu0 %1830
      %1832 = vrot.lane.b32.xlu0 %v1778, 127
      %v1833 = vpop.permute.xlu0 %1832
      %1834 = vrot.lane.b32.xlu0 %v1779, 127
      %v1835 = vpop.permute.xlu0 %1834
      %1844 = vrot.lane.b32.xlu0 %v1772, 15
      %v1845 = vpop.permute.xlu0 %1844
      %1846 = vrot.lane.b32.xlu0 %v1773, 15
      %v1847 = vpop.permute.xlu0 %1846
      %1848 = vrot.lane.b32.xlu0 %v1774, 15
      %v1849 = vpop.permute.xlu0 %1848
      %1850 = vrot.lane.b32.xlu0 %v1775, 15
      %v1851 = vpop.permute.xlu0 %1850
      %1852 = vrot.lane.b32.xlu0 %v1776, 15
      %v1853 = vpop.permute.xlu0 %1852
      %1854 = vrot.lane.b32.xlu0 %v1777, 15
      %v1855 = vpop.permute.xlu0 %1854
      %1856 = vrot.lane.b32.xlu0 %v1778, 15
      %v1857 = vpop.permute.xlu0 %1856
      %1858 = vrot.lane.b32.xlu0 %v1779, 15
      %v1859 = vpop.permute.xlu0 %1858
      %vm1868 = vcmask 121856
      %v1869 = vsel %vm1868, %v1821, %v1845
      %v1870 = vsel %vm1868, %v1823, %v1847
      %v1871 = vsel %vm1868, %v1825, %v1849
      %v1872 = vsel %vm1868, %v1827, %v1851
      %v1873 = vsel %vm1868, %v1829, %v1853
      %v1874 = vsel %vm1868, %v1831, %v1855
      %v1875 = vsel %vm1868, %v1833, %v1857
      %v1876 = vsel %vm1868, %v1835, %v1859
      %vm1877 = vcmp.lt.s32.totalorder %v289, 1
      %v1878 = vsel %vm1877, %v1772, %v1869
      %v1879 = vsel %vm1877, %v1773, %v1870
      %v1880 = vsel %vm1877, %v1774, %v1871
      %v1881 = vsel %vm1877, %v1775, %v1872
      %v1882 = vsel %vm1877, %v1776, %v1873
      %v1883 = vsel %vm1877, %v1777, %v1874
      %v1884 = vsel %vm1877, %v1778, %v1875
      %v1885 = vsel %vm1877, %v1779, %v1876
      %vm1886 = vcmp.eq.s32.totalorder %v289, 15
      %1888 = vset.pattern.permute.xlu0 1
      %1889 = vperm.xlu0 %1888, %v1804
      %v1890 = vpop.permute.xlu0 %1889
      %1893 = vset.pattern.permute.xlu0 1
      %1894 = vperm.xlu0 %1893, %v1805
      %v1895 = vpop.permute.xlu0 %1894
      %1898 = vset.pattern.permute.xlu0 1
      %1899 = vperm.xlu0 %1898, %v1806
      %v1900 = vpop.permute.xlu0 %1899
      %1903 = vset.pattern.permute.xlu0 1
      %1904 = vperm.xlu0 %1903, %v1807
      %v1905 = vpop.permute.xlu0 %1904
      %1908 = vset.pattern.permute.xlu0 1
      %1909 = vperm.xlu0 %1908, %v1808
      %v1910 = vpop.permute.xlu0 %1909
      %1913 = vset.pattern.permute.xlu0 1
      %1914 = vperm.xlu0 %1913, %v1809
      %v1915 = vpop.permute.xlu0 %1914
      %1918 = vset.pattern.permute.xlu0 1
      %1919 = vperm.xlu0 %1918, %v1810
      %v1920 = vpop.permute.xlu0 %1919
      %1923 = vset.pattern.permute.xlu0 1
      %1924 = vperm.xlu0 %1923, %v1811
      %v1925 = vpop.permute.xlu0 %1924
      %v1927 = vsel %vm1886, %v1890, %v1878
      %v1928 = vsel %vm1886, %v1895, %v1879
      %v1929 = vsel %vm1886, %v1900, %v1880
      %v1930 = vsel %vm1886, %v1905, %v1881
      %v1931 = vsel %vm1886, %v1910, %v1882
      %v1932 = vsel %vm1886, %v1915, %v1883
      %v1933 = vsel %vm1886, %v1920, %v1884
      %v1934 = vsel %vm1886, %v1925, %v1885
      %1935 = vst.msk [vmem:[%s278] sm:$0xff] %vm350, %v1927
      %1936 = vst.msk [vmem:[%s278 + $0x8] sm:$0xff] %vm350, %v1928
      %1937 = vst.msk [vmem:[%s278 + $0x10] sm:$0xff] %vm350, %v1929
      %1938 = vst.msk [vmem:[%s278 + $0x18] sm:$0xff] %vm350, %v1930
      %1939 = vst.msk [vmem:[%s278 + $0x20] sm:$0xff] %vm350, %v1931
      %1940 = vst.msk [vmem:[%s278 + $0x28] sm:$0xff] %vm350, %v1932
      %1941 = vst.msk [vmem:[%s278 + $0x30] sm:$0xff] %vm350, %v1933
      %1942 = vst.msk [vmem:[%s278 + $0x38] sm:$0xff] %vm350, %v1934
      %p1943 = scmp.lt.s32.totalorder %s18, 1
      %s1944 = scalar_select %p1943, %s18, 1
      %s1945 = smul.addr %s1944, 8
      %s1946 = smul.addr %s1945, 8
      %s1947 = scalar_lea.vmem %s7, %s1946
      // Predicated region
      $region49: #{tpu_custom_call.1} parent=47 // pred_check
        %p1948 = pneg %p188
      $region50: #{tpu_custom_call.1} parent=47 // pred_check_branch
        %1950 = sbr.rel (%p1948) target = $region52
      $region51: #{tpu_custom_call.1} parent=47 // pred_region
        _
      $region52: #{tpu_custom_call.1} parent=47 // pred_fallthru
        _
    $region48: #{tpu_custom_call.1} parent=5 // pred_fallthru
      _
    %p1951 = scmp.le.s32.totalorder 2, %s13
    // Predicated region
    $region53: #{tpu_custom_call.1} parent=5 // pred_check
      %p1952 = pneg %p1951
    $region54: #{tpu_custom_call.1} parent=5 // pred_check_branch
      %1954 = sbr.rel (%p1952) target = $region56
    $region55: #{tpu_custom_call.1} parent=5 // pred_region
      %s1955 = ssub.s32 %s13, 2
      // Predicated region
      $region57: #{tpu_custom_call.1} parent=55 // pred_check
        %p1956 = pneg %p194
      $region58: #{tpu_custom_call.1} parent=55 // pred_check_branch
        %1958 = sbr.rel (%p1956) target = $region60
      $region59: #{tpu_custom_call.1} parent=55 // pred_region
        %p1959 = scmp.lt.s32.totalorder %s19, 1
        %s1960 = scalar_select %p1959, %s19, 1
        %s1961 = smul.addr %s1960, 8
        %s1962 = smul.addr %s1961, 8
        %s1963 = scalar_lea.vmem %s7, %s1962
      $region60: #{tpu_custom_call.1} parent=55 // pred_fallthru
        _
    $region56: #{tpu_custom_call.1} parent=5 // pred_fallthru
      _
  $region6: #{tpu_custom_call.1} parent=0 // loop_footer
    %s17 = sadd.s32 1, %s13
  $region7: #{tpu_custom_call.1} parent=0 // loop_footer_branch
    %12 = sbr.rel target = $region3
  $region8: #{tpu_custom_call.1} parent=0 // loop_exit
    _

</llo_original>
